<compile_context>
chip_gen: v7x
topology: tpu7x:2x2x1
jax: 0.10.0
libtpu: 0.0.40
codegen_flags: <defaults>
</compile_context>

<pallas_src>
import functools

import jax
import jax.numpy as jnp
from jax.experimental import pallas as pl
from jax.experimental.pallas import tpu as pltpu

NEG_SLOPE_ATT = 0.2    # GATConv attention LeakyReLU (PyG default)
NEG_SLOPE_ACT = 0.01   # torch.nn.LeakyReLU() default
BN_EPS = 1e-5
MASK_VAL = -1e9        # finite additive mask (exp underflows to 0, no NaN)


def _leaky(x, slope):
    return jnp.where(x > 0, x, slope * x)


# ----------------------------------------------------------------------------
# One fused kernel for the entire forward pass.
# ----------------------------------------------------------------------------
def fused_forward_kernel(x_ref, g_ref, rp_ref, wa_ref, wb_ref, out_ref, *,
                         heads1, hidden):
    f32, bf16 = jnp.float32, jnp.bfloat16
    n = x_ref.shape[0]          # nodes
    nf = x_ref.shape[1]         # input features
    c1 = heads1 * hidden        # 256 (conv1 concat width)
    c2 = 2 * hidden             # 128 (conv2 width / head width)

    # ---- graph slab: attention mask, GCN-normalized adjacency, pool matrix --
    att_bias = g_ref[0:n, :]                              # [N,N] f32 additive mask
    adjn = g_ref[n:2 * n, :].astype(bf16)                 # [N,N]
    pool = g_ref[2 * n:2 * n + 8, :].astype(bf16)         # [8,N] (rows >= G zero)

    # ---- per-channel row slab (one DMA for all bias/BN/attention vectors) ---
    rp = rp_ref[...]
    bias1, scale1, shift1 = rp[0:1, :], rp[1:2, :], rp[2:3, :]          # [1,256]
    asrc2, adst2 = rp[3:4, :c2], rp[4:5, :c2]                           # [1,128]
    bias2, scale2, shift2 = rp[5:6, :c2], rp[6:7, :c2], rp[7:8, :c2]
    b3 = rp[8:9, :c2]                     # cols >= hidden are zero
    bl1, scale3, shift3 = rp[9:10, :c2], rp[10:11, :c2], rp[11:12, :c2]
    bl2 = rp[12:13, :c2]                  # cols >= num_classes are zero

    # ---- weight slabs (bf16 MXU operands) -----------------------------------
    w1 = wa_ref[0:nf, :]                          # [F, 4H]
    asrc1 = wa_ref[nf:nf + heads1, :]             # [heads, 4H] block rows
    adst1 = wb_ref[0:c1, :]                       # [4H, 128]  (cols < heads valid)
    w2 = wb_ref[c1:2 * c1, :]                     # [4H, 2H]
    w3p = wb_ref[2 * c1:2 * c1 + c2, :]           # [2H, 128]  (cols < H valid)
    wl1p = wb_ref[2 * c1 + c2:2 * c1 + 2 * c2, :]   # [128,128] (rows < H valid)
    wl2p = wb_ref[2 * c1 + 2 * c2:2 * c1 + 3 * c2, :]  # [128,128] (cols < C valid)

    # --- conv1: GATConv(F, H, heads=4) -> LeakyReLU -> BatchNorm (folded) ----
    x = x_ref[...].astype(bf16)
    xp1 = jnp.dot(x, w1, preferred_element_type=f32)            # [N, 4H]
    xp1_bf = xp1.astype(bf16)

    # Batched alpha terms: one matmul per side instead of per-head reduces.
    ad_all = jnp.dot(xp1_bf, adst1, preferred_element_type=f32)          # [N,128]
    as_all = jax.lax.dot_general(asrc1, xp1_bf, (((1,), (1,)), ((), ())),
                                 preferred_element_type=f32)             # [heads,N]

    xp2 = jnp.zeros((n, c2), f32)          # accumulated conv2 projection
    for h in range(heads1):                # statically unrolled
        lo = h * hidden
        # score[i,j] for edge j -> i; finite mask added; no max-subtraction
        # (scores are O(1) for this parameter scale).
        s = _leaky(ad_all[:, h:h + 1] + as_all[h:h + 1, :], NEG_SLOPE_ATT) + att_bias
        p = jnp.exp(s)
        # TODO(synk): attention dropout (p=0.6) is identity in eval mode.
        p = p * pl.reciprocal(jnp.sum(p, axis=-1, keepdims=True), approx=True)
        agg = jnp.dot(p.astype(bf16), xp1_bf[:, lo:lo + hidden],
                      preferred_element_type=f32)                        # [N,H]
        x1h = (scale1[:, lo:lo + hidden]
               * _leaky(agg + bias1[:, lo:lo + hidden], NEG_SLOPE_ACT)
               + shift1[:, lo:lo + hidden])
        # Accumulate straight into the conv2 projection (no lane concat).
        xp2 = xp2 + jnp.dot(x1h.astype(bf16), w2[lo:lo + hidden, :],
                            preferred_element_type=f32)                  # [N,2H]

    # --- conv2: GATConv(4H, 2H, heads=1) -> LeakyReLU -> BatchNorm -----------
    xp2_bf = xp2.astype(bf16)
    ad2 = jnp.sum(xp2 * adst2, axis=-1, keepdims=True)                   # [N,1]
    as2 = jax.lax.dot_general(asrc2.astype(bf16), xp2_bf,
                              (((1,), (1,)), ((), ())),
                              preferred_element_type=f32)                # [1,N]
    s2 = _leaky(ad2 + as2, NEG_SLOPE_ATT) + att_bias
    p2 = jnp.exp(s2)
    p2 = p2 * pl.reciprocal(jnp.sum(p2, axis=-1, keepdims=True), approx=True)
    h2 = jnp.dot(p2.astype(bf16), xp2_bf, preferred_element_type=f32)    # [N,2H]
    x2 = scale2 * _leaky(h2 + bias2, NEG_SLOPE_ACT) + shift2

    # --- conv3: GCNConv(2H, H) -> LeakyReLU -> (dropout id) -> mean pool -----
    xp3 = jnp.dot(x2.astype(bf16), w3p, preferred_element_type=f32)      # [N,128]
    h3 = jnp.dot(adjn, xp3.astype(bf16), preferred_element_type=f32) + b3
    x3 = _leaky(h3, NEG_SLOPE_ACT)
    # TODO(synk): dropout3 (p=0.6) is identity in eval mode.
    pooled = jnp.dot(pool, x3.astype(bf16), preferred_element_type=f32)  # [8,128]

    # --- lin1 -> BatchNorm (folded) -> LeakyReLU -> (dropout id) -> lin2 -----
    z = jnp.dot(pooled.astype(bf16), wl1p, preferred_element_type=f32) + bl1
    z = _leaky(scale3 * z + shift3, NEG_SLOPE_ACT)
    # TODO(synk): dropout4 (p=0.6) is identity in eval mode.
    out_ref[...] = jnp.dot(z.astype(bf16), wl2p, preferred_element_type=f32) + bl2


def m2_forward(x, graph_slab, rowparams, wslab_a, wslab_b, *,
               heads1, hidden, num_classes, num_graphs):
    kernel = functools.partial(fused_forward_kernel, heads1=heads1, hidden=hidden)
    args = (x, graph_slab, rowparams, wslab_a, wslab_b)
    out = pl.pallas_call(
        kernel,
        out_shape=jax.ShapeDtypeStruct((8, 128), jnp.float32),
        grid=(1,),
        in_specs=[pl.BlockSpec(a.shape, lambda i: (0, 0)) for a in args],
        out_specs=pl.BlockSpec((8, 128), lambda i: (0, 0)),
        compiler_params=pltpu.CompilerParams(
            dimension_semantics=("arbitrary",)),
    )(*args)
    return out[:num_graphs, :num_classes]


def _bn_fold(gamma, beta, running_mean, running_var):
    """Eval-mode BatchNorm1d folded into scale/shift."""
    scale = gamma / jnp.sqrt(running_var + BN_EPS)
    shift = beta - running_mean * scale
    return scale, shift


if __name__ == "__main__":
    num_features = 16
    hidden = 64          # must satisfy 2*hidden == 128 for norm3 to type-check
    num_classes = 4
    heads1 = 4
    N = 32               # nodes (2 graphs of 16)
    G = 2                # graphs
    C1 = heads1 * hidden     # 256
    C2 = 2 * hidden          # 128

    key = jax.random.PRNGKey(0)
    ks = jax.random.split(key, 24)

    # ---- graph structure (deterministic ring per graph, undirected) ----
    srcs, dsts = [], []
    for gi in range(G):
        base = gi * (N // G)
        for i in range(N // G):
            a = base + i
            b = base + (i + 1) % (N // G)
            srcs += [a, b]
            dsts += [b, a]
    edge_index = jnp.array([srcs, dsts], dtype=jnp.int32)    # [2, E]
    batch = jnp.array([gi for gi in range(G) for _ in range(N // G)], jnp.int32)

    # dense adjacency A[dst, src] = 1, plus self loops (GAT default)
    adj = jnp.zeros((N, N), jnp.float32).at[edge_index[1], edge_index[0]].set(1.0)
    adj_gat = jnp.maximum(adj, jnp.eye(N, dtype=jnp.float32))
    att_bias = jnp.where(adj_gat > 0, 0.0, MASK_VAL).astype(jnp.float32)
    # GCN normalization: A_hat = D^{-1/2} (A + I) D^{-1/2}
    a_sl = jnp.maximum(adj, jnp.eye(N, dtype=jnp.float32))
    deg = jnp.sum(a_sl, axis=1)
    dinv = 1.0 / jnp.sqrt(deg)
    adj_gcn_norm = a_sl * dinv[:, None] * dinv[None, :]
    # mean-pool matrix P[g, n]
    counts = jnp.sum(jnp.eye(G, dtype=jnp.float32)[batch], axis=0)      # [G]
    pool_mat = (jnp.eye(G, dtype=jnp.float32)[batch].T) / counts[:, None]
    pool_pad = jnp.zeros((8, N), jnp.float32).at[:G, :].set(pool_mat)

    graph_slab = jnp.concatenate([att_bias, adj_gcn_norm, pool_pad], axis=0)  # [72,32]

    # ---- deterministic synthetic parameters ----
    def rnd(k, shape, s=0.1):
        return s * jax.random.normal(k, shape, jnp.float32)

    w1 = rnd(ks[0], (num_features, C1))
    asrc1 = rnd(ks[1], (C1,))
    adst1 = rnd(ks[2], (C1,))
    bias1 = rnd(ks[3], (C1,))
    w2 = rnd(ks[4], (C1, C2))
    asrc2 = rnd(ks[5], (C2,))
    adst2 = rnd(ks[6], (C2,))
    bias2 = rnd(ks[7], (C2,))
    w3 = rnd(ks[8], (C2, hidden))
    b3 = rnd(ks[9], (hidden,))
    wl1 = rnd(ks[10], (hidden, 128))
    bl1 = rnd(ks[11], (128,))
    wl2 = rnd(ks[12], (128, num_classes))
    bl2 = rnd(ks[13], (num_classes,))

    zeros = lambda n: jnp.zeros((n,), jnp.float32)
    ones = lambda n: jnp.ones((n,), jnp.float32)
    scale1, shift1 = _bn_fold(1.0 + rnd(ks[14], (C1,)), rnd(ks[15], (C1,)),
                              zeros(C1), ones(C1))
    scale2, shift2 = _bn_fold(1.0 + rnd(ks[16], (C2,)), rnd(ks[17], (C2,)),
                              zeros(C2), ones(C2))
    scale3, shift3 = _bn_fold(1.0 + rnd(ks[18], (128,)), rnd(ks[19], (128,)),
                              zeros(128), ones(128))

    # ---- host-side packing into slabs (cuts prologue DMA count ~4x) --------
    # block-diagonal attention-vector matrices for batched alpha matmuls
    asrc1_blk = jnp.zeros((heads1, C1), jnp.float32)
    adst1_blk = jnp.zeros((C1, 128), jnp.float32)
    for h in range(heads1):
        lo = h * hidden
        asrc1_blk = asrc1_blk.at[h, lo:lo + hidden].set(asrc1[lo:lo + hidden])
        adst1_blk = adst1_blk.at[lo:lo + hidden, h].set(adst1[lo:lo + hidden])

    # per-channel row slab (f32)
    rowparams = jnp.zeros((16, 256), jnp.float32)
    rowparams = rowparams.at[0, :].set(bias1)
    rowparams = rowparams.at[1, :].set(scale1)
    rowparams = rowparams.at[2, :].set(shift1)
    rowparams = rowparams.at[3, :C2].set(asrc2)
    rowparams = rowparams.at[4, :C2].set(adst2)
    rowparams = rowparams.at[5, :C2].set(bias2)
    rowparams = rowparams.at[6, :C2].set(scale2)
    rowparams = rowparams.at[7, :C2].set(shift2)
    rowparams = rowparams.at[8, :hidden].set(b3)
    rowparams = rowparams.at[9, :128].set(bl1)
    rowparams = rowparams.at[10, :128].set(scale3)
    rowparams = rowparams.at[11, :128].set(shift3)
    rowparams = rowparams.at[12, :num_classes].set(bl2)

    # bf16 weight slabs (MXU operands, halves weight DMA bytes)
    wslab_a = jnp.zeros((24, 256), jnp.float32)
    wslab_a = wslab_a.at[0:num_features, :].set(w1)
    wslab_a = wslab_a.at[num_features:num_features + heads1, :].set(asrc1_blk)
    wslab_a = wslab_a.astype(jnp.bfloat16)

    w3_pad = jnp.zeros((128, 128), jnp.float32).at[:, :hidden].set(w3)
    wl1_pad = jnp.zeros((128, 128), jnp.float32).at[:hidden, :].set(wl1)
    wl2_pad = jnp.zeros((128, 128), jnp.float32).at[:, :num_classes].set(wl2)

    wslab_b = jnp.zeros((2 * C1 + 3 * C2, 128), jnp.float32)      # [896,128]
    wslab_b = wslab_b.at[0:C1, :].set(adst1_blk)
    wslab_b = wslab_b.at[C1:2 * C1, :].set(w2)
    wslab_b = wslab_b.at[2 * C1:2 * C1 + C2, :].set(w3_pad)
    wslab_b = wslab_b.at[2 * C1 + C2:2 * C1 + 2 * C2, :].set(wl1_pad)
    wslab_b = wslab_b.at[2 * C1 + 2 * C2:2 * C1 + 3 * C2, :].set(wl2_pad)
    wslab_b = wslab_b.astype(jnp.bfloat16)

    x = jax.random.normal(jax.random.PRNGKey(42), (N, num_features), jnp.float32)

    forward = jax.jit(functools.partial(
        m2_forward, heads1=heads1, hidden=hidden,
        num_classes=num_classes, num_graphs=G))
    out = forward(x, graph_slab, rowparams, wslab_a, wslab_b)
    jax.block_until_ready(out)
    assert out.shape == (G, num_classes)
    assert bool(jnp.all(jnp.isfinite(out)))
    print("KERNEL_OK")
</pallas_src>

<mosaic_0001>
module attributes {stable_mosaic.version = 11 : i64} {
  func.func @fused_forward_kernel(%arg0: i32, %arg1: memref<32x16xf32, #tpu.memory_space<vmem>>, %arg2: memref<72x32xf32, #tpu.memory_space<vmem>>, %arg3: memref<16x256xf32, #tpu.memory_space<vmem>>, %arg4: memref<24x256xbf16, #tpu.memory_space<vmem>>, %arg5: memref<896x128xbf16, #tpu.memory_space<vmem>>, %arg6: memref<8x128xf32, #tpu.memory_space<vmem>>) attributes {dimension_semantics = [#tpu.dimension_semantics<arbitrary>], iteration_bounds = array<i64: 1>, scalar_prefetch = 0 : i64, scratch_operands = 0 : i64, tpu.core_type = #tpu.core_type<tc>, window_params = [{pipeline_mode = #tpu.pipeline_mode<synchronous>, transform_indices = @transform_0, window_bounds = array<i64: 32, 16>}, {pipeline_mode = #tpu.pipeline_mode<synchronous>, transform_indices = @transform_1, window_bounds = array<i64: 72, 32>}, {pipeline_mode = #tpu.pipeline_mode<synchronous>, transform_indices = @transform_2, window_bounds = array<i64: 16, 256>}, {pipeline_mode = #tpu.pipeline_mode<synchronous>, transform_indices = @transform_3, window_bounds = array<i64: 24, 256>}, {pipeline_mode = #tpu.pipeline_mode<synchronous>, transform_indices = @transform_4, window_bounds = array<i64: 896, 128>}, {pipeline_mode = #tpu.pipeline_mode<synchronous>, transform_indices = @transform_5, window_bounds = array<i64: 8, 128>}]} {
    %c0 = arith.constant 0 : index
    %c0_0 = arith.constant 0 : index
    %0 = vector.load %arg2[%c0, %c0_0] : memref<72x32xf32, #tpu.memory_space<vmem>>, vector<32x32xf32>
    %c32 = arith.constant 32 : index
    %c0_1 = arith.constant 0 : index
    %1 = vector.load %arg2[%c32, %c0_1] : memref<72x32xf32, #tpu.memory_space<vmem>>, vector<32x32xf32>
    %2 = arith.truncf %1 : vector<32x32xf32> to vector<32x32xbf16>
    %c64 = arith.constant 64 : index
    %c0_2 = arith.constant 0 : index
    %3 = vector.load %arg2[%c64, %c0_2] : memref<72x32xf32, #tpu.memory_space<vmem>>, vector<8x32xf32>
    %4 = arith.truncf %3 : vector<8x32xf32> to vector<8x32xbf16>
    %c0_3 = arith.constant 0 : index
    %c0_4 = arith.constant 0 : index
    %5 = vector.load %arg3[%c0_3, %c0_4] : memref<16x256xf32, #tpu.memory_space<vmem>>, vector<16x256xf32>
    %6 = vector.extract_strided_slice %5 {offsets = [0, 0], sizes = [1, 256], strides = [1, 1]} : vector<16x256xf32> to vector<1x256xf32>
    %7 = vector.extract_strided_slice %5 {offsets = [1, 0], sizes = [1, 256], strides = [1, 1]} : vector<16x256xf32> to vector<1x256xf32>
    %8 = vector.extract_strided_slice %5 {offsets = [2, 0], sizes = [1, 256], strides = [1, 1]} : vector<16x256xf32> to vector<1x256xf32>
    %9 = vector.extract_strided_slice %5 {offsets = [3, 0], sizes = [1, 128], strides = [1, 1]} : vector<16x256xf32> to vector<1x128xf32>
    %10 = vector.extract_strided_slice %5 {offsets = [4, 0], sizes = [1, 128], strides = [1, 1]} : vector<16x256xf32> to vector<1x128xf32>
    %11 = vector.extract_strided_slice %5 {offsets = [5, 0], sizes = [1, 128], strides = [1, 1]} : vector<16x256xf32> to vector<1x128xf32>
    %12 = vector.extract_strided_slice %5 {offsets = [6, 0], sizes = [1, 128], strides = [1, 1]} : vector<16x256xf32> to vector<1x128xf32>
    %13 = vector.extract_strided_slice %5 {offsets = [7, 0], sizes = [1, 128], strides = [1, 1]} : vector<16x256xf32> to vector<1x128xf32>
    %14 = vector.extract_strided_slice %5 {offsets = [8, 0], sizes = [1, 128], strides = [1, 1]} : vector<16x256xf32> to vector<1x128xf32>
    %15 = vector.extract_strided_slice %5 {offsets = [9, 0], sizes = [1, 128], strides = [1, 1]} : vector<16x256xf32> to vector<1x128xf32>
    %16 = vector.extract_strided_slice %5 {offsets = [10, 0], sizes = [1, 128], strides = [1, 1]} : vector<16x256xf32> to vector<1x128xf32>
    %17 = vector.extract_strided_slice %5 {offsets = [11, 0], sizes = [1, 128], strides = [1, 1]} : vector<16x256xf32> to vector<1x128xf32>
    %18 = vector.extract_strided_slice %5 {offsets = [12, 0], sizes = [1, 128], strides = [1, 1]} : vector<16x256xf32> to vector<1x128xf32>
    %c0_5 = arith.constant 0 : index
    %c0_6 = arith.constant 0 : index
    %19 = vector.load %arg4[%c0_5, %c0_6] : memref<24x256xbf16, #tpu.memory_space<vmem>>, vector<16x256xbf16>
    %c16 = arith.constant 16 : index
    %c0_7 = arith.constant 0 : index
    %20 = vector.load %arg4[%c16, %c0_7] : memref<24x256xbf16, #tpu.memory_space<vmem>>, vector<4x256xbf16>
    %c0_8 = arith.constant 0 : index
    %c0_9 = arith.constant 0 : index
    %21 = vector.load %arg5[%c0_8, %c0_9] : memref<896x128xbf16, #tpu.memory_space<vmem>>, vector<256x128xbf16>
    %c256 = arith.constant 256 : index
    %c0_10 = arith.constant 0 : index
    %22 = vector.load %arg5[%c256, %c0_10] : memref<896x128xbf16, #tpu.memory_space<vmem>>, vector<256x128xbf16>
    %c512 = arith.constant 512 : index
    %c0_11 = arith.constant 0 : index
    %23 = vector.load %arg5[%c512, %c0_11] : memref<896x128xbf16, #tpu.memory_space<vmem>>, vector<128x128xbf16>
    %c640 = arith.constant 640 : index
    %c0_12 = arith.constant 0 : index
    %24 = vector.load %arg5[%c640, %c0_12] : memref<896x128xbf16, #tpu.memory_space<vmem>>, vector<128x128xbf16>
    %c768 = arith.constant 768 : index
    %c0_13 = arith.constant 0 : index
    %25 = vector.load %arg5[%c768, %c0_13] : memref<896x128xbf16, #tpu.memory_space<vmem>>, vector<128x128xbf16>
    %c0_14 = arith.constant 0 : index
    %c0_15 = arith.constant 0 : index
    %26 = vector.load %arg1[%c0_14, %c0_15] : memref<32x16xf32, #tpu.memory_space<vmem>>, vector<32x16xf32>
    %27 = arith.truncf %26 : vector<32x16xf32> to vector<32x16xbf16>
    %cst = arith.constant dense<0.000000e+00> : vector<32x256xf32>
    %28 = tpu.matmul %27, %19, %cst {dimension_numbers = #tpu.dot_dimension_numbers<[1], [0], [0], [1], [0, 0, 1, 1], [], []>} : vector<32x16xbf16>, vector<16x256xbf16>, vector<32x256xf32> -> vector<32x256xf32>
    %29 = arith.truncf %28 : vector<32x256xf32> to vector<32x256xbf16>
    %cst_16 = arith.constant dense<0.000000e+00> : vector<32x128xf32>
    %30 = tpu.matmul %29, %21, %cst_16 {dimension_numbers = #tpu.dot_dimension_numbers<[1], [0], [0], [1], [0, 0, 1, 1], [], []>} : vector<32x256xbf16>, vector<256x128xbf16>, vector<32x128xf32> -> vector<32x128xf32>
    %cst_17 = arith.constant dense<0.000000e+00> : vector<4x32xf32>
    %31 = tpu.matmul %20, %29, %cst_17 {dimension_numbers = #tpu.dot_dimension_numbers<[1], [1], [0], [0], [0, 0, 1, 0], [], []>} : vector<4x256xbf16>, vector<32x256xbf16>, vector<4x32xf32> -> vector<4x32xf32>
    %cst_18 = arith.constant 0.000000e+00 : f32
    %32 = vector.broadcast %cst_18 : f32 to vector<32x128xf32>
    %33 = vector.extract_strided_slice %30 {offsets = [0, 0], sizes = [32, 1], strides = [1, 1]} : vector<32x128xf32> to vector<32x1xf32>
    %34 = vector.extract_strided_slice %31 {offsets = [0, 0], sizes = [1, 32], strides = [1, 1]} : vector<4x32xf32> to vector<1x32xf32>
    %35 = vector.broadcast %33 : vector<32x1xf32> to vector<32x32xf32>
    %36 = vector.broadcast %34 : vector<1x32xf32> to vector<32x32xf32>
    %37 = arith.addf %35, %36 : vector<32x32xf32>
    %cst_19 = arith.constant 0.000000e+00 : f32
    %38 = vector.broadcast %cst_19 : f32 to vector<32x32xf32>
    %39 = arith.cmpf ogt, %37, %38 : vector<32x32xf32>
    %cst_20 = arith.constant 2.000000e-01 : f32
    %40 = vector.broadcast %cst_20 : f32 to vector<32x32xf32>
    %41 = arith.mulf %40, %37 : vector<32x32xf32>
    %42 = arith.select %39, %37, %41 : vector<32x32xi1>, vector<32x32xf32>
    %43 = arith.addf %42, %0 : vector<32x32xf32>
    %44 = math.exp %43 : vector<32x32xf32>
    %cst_21 = arith.constant dense<0.000000e+00> : vector<32xf32>
    %45 = vector.multi_reduction <add>, %44, %cst_21 [1] : vector<32x32xf32> to vector<32xf32>
    %46 = vector.shape_cast %45 : vector<32xf32> to vector<32x1xf32>
    %47 = tpu.reciprocal %46 {approx = true} : vector<32x1xf32> -> vector<32x1xf32>
    %48 = vector.broadcast %47 : vector<32x1xf32> to vector<32x32xf32>
    %49 = arith.mulf %44, %48 : vector<32x32xf32>
    %50 = arith.truncf %49 : vector<32x32xf32> to vector<32x32xbf16>
    %51 = vector.extract_strided_slice %29 {offsets = [0, 0], sizes = [32, 64], strides = [1, 1]} : vector<32x256xbf16> to vector<32x64xbf16>
    %cst_22 = arith.constant dense<0.000000e+00> : vector<32x64xf32>
    %52 = tpu.matmul %50, %51, %cst_22 {dimension_numbers = #tpu.dot_dimension_numbers<[1], [0], [0], [1], [0, 0, 1, 1], [], []>} : vector<32x32xbf16>, vector<32x64xbf16>, vector<32x64xf32> -> vector<32x64xf32>
    %53 = vector.extract_strided_slice %7 {offsets = [0, 0], sizes = [1, 64], strides = [1, 1]} : vector<1x256xf32> to vector<1x64xf32>
    %54 = vector.extract_strided_slice %6 {offsets = [0, 0], sizes = [1, 64], strides = [1, 1]} : vector<1x256xf32> to vector<1x64xf32>
    %55 = vector.broadcast %54 : vector<1x64xf32> to vector<32x64xf32>
    %56 = arith.addf %52, %55 : vector<32x64xf32>
    %cst_23 = arith.constant 0.000000e+00 : f32
    %57 = vector.broadcast %cst_23 : f32 to vector<32x64xf32>
    %58 = arith.cmpf ogt, %56, %57 : vector<32x64xf32>
    %cst_24 = arith.constant 0.00999999977 : f32
    %59 = vector.broadcast %cst_24 : f32 to vector<32x64xf32>
    %60 = arith.mulf %59, %56 : vector<32x64xf32>
    %61 = arith.select %58, %56, %60 : vector<32x64xi1>, vector<32x64xf32>
    %62 = vector.broadcast %53 : vector<1x64xf32> to vector<32x64xf32>
    %63 = arith.mulf %62, %61 : vector<32x64xf32>
    %64 = vector.extract_strided_slice %8 {offsets = [0, 0], sizes = [1, 64], strides = [1, 1]} : vector<1x256xf32> to vector<1x64xf32>
    %65 = vector.broadcast %64 : vector<1x64xf32> to vector<32x64xf32>
    %66 = arith.addf %63, %65 : vector<32x64xf32>
    %67 = arith.truncf %66 : vector<32x64xf32> to vector<32x64xbf16>
    %68 = vector.extract_strided_slice %22 {offsets = [0, 0], sizes = [64, 128], strides = [1, 1]} : vector<256x128xbf16> to vector<64x128xbf16>
    %cst_25 = arith.constant dense<0.000000e+00> : vector<32x128xf32>
    %69 = tpu.matmul %67, %68, %cst_25 {dimension_numbers = #tpu.dot_dimension_numbers<[1], [0], [0], [1], [0, 0, 1, 1], [], []>} : vector<32x64xbf16>, vector<64x128xbf16>, vector<32x128xf32> -> vector<32x128xf32>
    %70 = arith.addf %32, %69 : vector<32x128xf32>
    %71 = vector.extract_strided_slice %30 {offsets = [0, 1], sizes = [32, 1], strides = [1, 1]} : vector<32x128xf32> to vector<32x1xf32>
    %72 = vector.extract_strided_slice %31 {offsets = [1, 0], sizes = [1, 32], strides = [1, 1]} : vector<4x32xf32> to vector<1x32xf32>
    %73 = vector.broadcast %71 : vector<32x1xf32> to vector<32x32xf32>
    %74 = vector.broadcast %72 : vector<1x32xf32> to vector<32x32xf32>
    %75 = arith.addf %73, %74 : vector<32x32xf32>
    %cst_26 = arith.constant 0.000000e+00 : f32
    %76 = vector.broadcast %cst_26 : f32 to vector<32x32xf32>
    %77 = arith.cmpf ogt, %75, %76 : vector<32x32xf32>
    %cst_27 = arith.constant 2.000000e-01 : f32
    %78 = vector.broadcast %cst_27 : f32 to vector<32x32xf32>
    %79 = arith.mulf %78, %75 : vector<32x32xf32>
    %80 = arith.select %77, %75, %79 : vector<32x32xi1>, vector<32x32xf32>
    %81 = arith.addf %80, %0 : vector<32x32xf32>
    %82 = math.exp %81 : vector<32x32xf32>
    %cst_28 = arith.constant dense<0.000000e+00> : vector<32xf32>
    %83 = vector.multi_reduction <add>, %82, %cst_28 [1] : vector<32x32xf32> to vector<32xf32>
    %84 = vector.shape_cast %83 : vector<32xf32> to vector<32x1xf32>
    %85 = tpu.reciprocal %84 {approx = true} : vector<32x1xf32> -> vector<32x1xf32>
    %86 = vector.broadcast %85 : vector<32x1xf32> to vector<32x32xf32>
    %87 = arith.mulf %82, %86 : vector<32x32xf32>
    %88 = arith.truncf %87 : vector<32x32xf32> to vector<32x32xbf16>
    %89 = vector.extract_strided_slice %29 {offsets = [0, 64], sizes = [32, 64], strides = [1, 1]} : vector<32x256xbf16> to vector<32x64xbf16>
    %cst_29 = arith.constant dense<0.000000e+00> : vector<32x64xf32>
    %90 = tpu.matmul %88, %89, %cst_29 {dimension_numbers = #tpu.dot_dimension_numbers<[1], [0], [0], [1], [0, 0, 1, 1], [], []>} : vector<32x32xbf16>, vector<32x64xbf16>, vector<32x64xf32> -> vector<32x64xf32>
    %91 = vector.extract_strided_slice %7 {offsets = [0, 64], sizes = [1, 64], strides = [1, 1]} : vector<1x256xf32> to vector<1x64xf32>
    %92 = vector.extract_strided_slice %6 {offsets = [0, 64], sizes = [1, 64], strides = [1, 1]} : vector<1x256xf32> to vector<1x64xf32>
    %93 = vector.broadcast %92 : vector<1x64xf32> to vector<32x64xf32>
    %94 = arith.addf %90, %93 : vector<32x64xf32>
    %cst_30 = arith.constant 0.000000e+00 : f32
    %95 = vector.broadcast %cst_30 : f32 to vector<32x64xf32>
    %96 = arith.cmpf ogt, %94, %95 : vector<32x64xf32>
    %cst_31 = arith.constant 0.00999999977 : f32
    %97 = vector.broadcast %cst_31 : f32 to vector<32x64xf32>
    %98 = arith.mulf %97, %94 : vector<32x64xf32>
    %99 = arith.select %96, %94, %98 : vector<32x64xi1>, vector<32x64xf32>
    %100 = vector.broadcast %91 : vector<1x64xf32> to vector<32x64xf32>
    %101 = arith.mulf %100, %99 : vector<32x64xf32>
    %102 = vector.extract_strided_slice %8 {offsets = [0, 64], sizes = [1, 64], strides = [1, 1]} : vector<1x256xf32> to vector<1x64xf32>
    %103 = vector.broadcast %102 : vector<1x64xf32> to vector<32x64xf32>
    %104 = arith.addf %101, %103 : vector<32x64xf32>
    %105 = arith.truncf %104 : vector<32x64xf32> to vector<32x64xbf16>
    %106 = vector.extract_strided_slice %22 {offsets = [64, 0], sizes = [64, 128], strides = [1, 1]} : vector<256x128xbf16> to vector<64x128xbf16>
    %cst_32 = arith.constant dense<0.000000e+00> : vector<32x128xf32>
    %107 = tpu.matmul %105, %106, %cst_32 {dimension_numbers = #tpu.dot_dimension_numbers<[1], [0], [0], [1], [0, 0, 1, 1], [], []>} : vector<32x64xbf16>, vector<64x128xbf16>, vector<32x128xf32> -> vector<32x128xf32>
    %108 = arith.addf %70, %107 : vector<32x128xf32>
    %109 = vector.extract_strided_slice %30 {offsets = [0, 2], sizes = [32, 1], strides = [1, 1]} : vector<32x128xf32> to vector<32x1xf32>
    %110 = vector.extract_strided_slice %31 {offsets = [2, 0], sizes = [1, 32], strides = [1, 1]} : vector<4x32xf32> to vector<1x32xf32>
    %111 = vector.broadcast %109 : vector<32x1xf32> to vector<32x32xf32>
    %112 = vector.broadcast %110 : vector<1x32xf32> to vector<32x32xf32>
    %113 = arith.addf %111, %112 : vector<32x32xf32>
    %cst_33 = arith.constant 0.000000e+00 : f32
    %114 = vector.broadcast %cst_33 : f32 to vector<32x32xf32>
    %115 = arith.cmpf ogt, %113, %114 : vector<32x32xf32>
    %cst_34 = arith.constant 2.000000e-01 : f32
    %116 = vector.broadcast %cst_34 : f32 to vector<32x32xf32>
    %117 = arith.mulf %116, %113 : vector<32x32xf32>
    %118 = arith.select %115, %113, %117 : vector<32x32xi1>, vector<32x32xf32>
    %119 = arith.addf %118, %0 : vector<32x32xf32>
    %120 = math.exp %119 : vector<32x32xf32>
    %cst_35 = arith.constant dense<0.000000e+00> : vector<32xf32>
    %121 = vector.multi_reduction <add>, %120, %cst_35 [1] : vector<32x32xf32> to vector<32xf32>
    %122 = vector.shape_cast %121 : vector<32xf32> to vector<32x1xf32>
    %123 = tpu.reciprocal %122 {approx = true} : vector<32x1xf32> -> vector<32x1xf32>
    %124 = vector.broadcast %123 : vector<32x1xf32> to vector<32x32xf32>
    %125 = arith.mulf %120, %124 : vector<32x32xf32>
    %126 = arith.truncf %125 : vector<32x32xf32> to vector<32x32xbf16>
    %127 = vector.extract_strided_slice %29 {offsets = [0, 128], sizes = [32, 64], strides = [1, 1]} : vector<32x256xbf16> to vector<32x64xbf16>
    %cst_36 = arith.constant dense<0.000000e+00> : vector<32x64xf32>
    %128 = tpu.matmul %126, %127, %cst_36 {dimension_numbers = #tpu.dot_dimension_numbers<[1], [0], [0], [1], [0, 0, 1, 1], [], []>} : vector<32x32xbf16>, vector<32x64xbf16>, vector<32x64xf32> -> vector<32x64xf32>
    %129 = vector.extract_strided_slice %7 {offsets = [0, 128], sizes = [1, 64], strides = [1, 1]} : vector<1x256xf32> to vector<1x64xf32>
    %130 = vector.extract_strided_slice %6 {offsets = [0, 128], sizes = [1, 64], strides = [1, 1]} : vector<1x256xf32> to vector<1x64xf32>
    %131 = vector.broadcast %130 : vector<1x64xf32> to vector<32x64xf32>
    %132 = arith.addf %128, %131 : vector<32x64xf32>
    %cst_37 = arith.constant 0.000000e+00 : f32
    %133 = vector.broadcast %cst_37 : f32 to vector<32x64xf32>
    %134 = arith.cmpf ogt, %132, %133 : vector<32x64xf32>
    %cst_38 = arith.constant 0.00999999977 : f32
    %135 = vector.broadcast %cst_38 : f32 to vector<32x64xf32>
    %136 = arith.mulf %135, %132 : vector<32x64xf32>
    %137 = arith.select %134, %132, %136 : vector<32x64xi1>, vector<32x64xf32>
    %138 = vector.broadcast %129 : vector<1x64xf32> to vector<32x64xf32>
    %139 = arith.mulf %138, %137 : vector<32x64xf32>
    %140 = vector.extract_strided_slice %8 {offsets = [0, 128], sizes = [1, 64], strides = [1, 1]} : vector<1x256xf32> to vector<1x64xf32>
    %141 = vector.broadcast %140 : vector<1x64xf32> to vector<32x64xf32>
    %142 = arith.addf %139, %141 : vector<32x64xf32>
    %143 = arith.truncf %142 : vector<32x64xf32> to vector<32x64xbf16>
    %144 = vector.extract_strided_slice %22 {offsets = [128, 0], sizes = [64, 128], strides = [1, 1]} : vector<256x128xbf16> to vector<64x128xbf16>
    %cst_39 = arith.constant dense<0.000000e+00> : vector<32x128xf32>
    %145 = tpu.matmul %143, %144, %cst_39 {dimension_numbers = #tpu.dot_dimension_numbers<[1], [0], [0], [1], [0, 0, 1, 1], [], []>} : vector<32x64xbf16>, vector<64x128xbf16>, vector<32x128xf32> -> vector<32x128xf32>
    %146 = arith.addf %108, %145 : vector<32x128xf32>
    %147 = vector.extract_strided_slice %30 {offsets = [0, 3], sizes = [32, 1], strides = [1, 1]} : vector<32x128xf32> to vector<32x1xf32>
    %148 = vector.extract_strided_slice %31 {offsets = [3, 0], sizes = [1, 32], strides = [1, 1]} : vector<4x32xf32> to vector<1x32xf32>
    %149 = vector.broadcast %147 : vector<32x1xf32> to vector<32x32xf32>
    %150 = vector.broadcast %148 : vector<1x32xf32> to vector<32x32xf32>
    %151 = arith.addf %149, %150 : vector<32x32xf32>
    %cst_40 = arith.constant 0.000000e+00 : f32
    %152 = vector.broadcast %cst_40 : f32 to vector<32x32xf32>
    %153 = arith.cmpf ogt, %151, %152 : vector<32x32xf32>
    %cst_41 = arith.constant 2.000000e-01 : f32
    %154 = vector.broadcast %cst_41 : f32 to vector<32x32xf32>
    %155 = arith.mulf %154, %151 : vector<32x32xf32>
    %156 = arith.select %153, %151, %155 : vector<32x32xi1>, vector<32x32xf32>
    %157 = arith.addf %156, %0 : vector<32x32xf32>
    %158 = math.exp %157 : vector<32x32xf32>
    %cst_42 = arith.constant dense<0.000000e+00> : vector<32xf32>
    %159 = vector.multi_reduction <add>, %158, %cst_42 [1] : vector<32x32xf32> to vector<32xf32>
    %160 = vector.shape_cast %159 : vector<32xf32> to vector<32x1xf32>
    %161 = tpu.reciprocal %160 {approx = true} : vector<32x1xf32> -> vector<32x1xf32>
    %162 = vector.broadcast %161 : vector<32x1xf32> to vector<32x32xf32>
    %163 = arith.mulf %158, %162 : vector<32x32xf32>
    %164 = arith.truncf %163 : vector<32x32xf32> to vector<32x32xbf16>
    %165 = vector.extract_strided_slice %29 {offsets = [0, 192], sizes = [32, 64], strides = [1, 1]} : vector<32x256xbf16> to vector<32x64xbf16>
    %cst_43 = arith.constant dense<0.000000e+00> : vector<32x64xf32>
    %166 = tpu.matmul %164, %165, %cst_43 {dimension_numbers = #tpu.dot_dimension_numbers<[1], [0], [0], [1], [0, 0, 1, 1], [], []>} : vector<32x32xbf16>, vector<32x64xbf16>, vector<32x64xf32> -> vector<32x64xf32>
    %167 = vector.extract_strided_slice %7 {offsets = [0, 192], sizes = [1, 64], strides = [1, 1]} : vector<1x256xf32> to vector<1x64xf32>
    %168 = vector.extract_strided_slice %6 {offsets = [0, 192], sizes = [1, 64], strides = [1, 1]} : vector<1x256xf32> to vector<1x64xf32>
    %169 = vector.broadcast %168 : vector<1x64xf32> to vector<32x64xf32>
    %170 = arith.addf %166, %169 : vector<32x64xf32>
    %cst_44 = arith.constant 0.000000e+00 : f32
    %171 = vector.broadcast %cst_44 : f32 to vector<32x64xf32>
    %172 = arith.cmpf ogt, %170, %171 : vector<32x64xf32>
    %cst_45 = arith.constant 0.00999999977 : f32
    %173 = vector.broadcast %cst_45 : f32 to vector<32x64xf32>
    %174 = arith.mulf %173, %170 : vector<32x64xf32>
    %175 = arith.select %172, %170, %174 : vector<32x64xi1>, vector<32x64xf32>
    %176 = vector.broadcast %167 : vector<1x64xf32> to vector<32x64xf32>
    %177 = arith.mulf %176, %175 : vector<32x64xf32>
    %178 = vector.extract_strided_slice %8 {offsets = [0, 192], sizes = [1, 64], strides = [1, 1]} : vector<1x256xf32> to vector<1x64xf32>
    %179 = vector.broadcast %178 : vector<1x64xf32> to vector<32x64xf32>
    %180 = arith.addf %177, %179 : vector<32x64xf32>
    %181 = arith.truncf %180 : vector<32x64xf32> to vector<32x64xbf16>
    %182 = vector.extract_strided_slice %22 {offsets = [192, 0], sizes = [64, 128], strides = [1, 1]} : vector<256x128xbf16> to vector<64x128xbf16>
    %cst_46 = arith.constant dense<0.000000e+00> : vector<32x128xf32>
    %183 = tpu.matmul %181, %182, %cst_46 {dimension_numbers = #tpu.dot_dimension_numbers<[1], [0], [0], [1], [0, 0, 1, 1], [], []>} : vector<32x64xbf16>, vector<64x128xbf16>, vector<32x128xf32> -> vector<32x128xf32>
    %184 = arith.addf %146, %183 : vector<32x128xf32>
    %185 = arith.truncf %184 : vector<32x128xf32> to vector<32x128xbf16>
    %186 = vector.broadcast %10 : vector<1x128xf32> to vector<32x128xf32>
    %187 = arith.mulf %184, %186 : vector<32x128xf32>
    %cst_47 = arith.constant dense<0.000000e+00> : vector<32xf32>
    %188 = vector.multi_reduction <add>, %187, %cst_47 [1] : vector<32x128xf32> to vector<32xf32>
    %189 = vector.shape_cast %188 : vector<32xf32> to vector<32x1xf32>
    %190 = arith.truncf %9 : vector<1x128xf32> to vector<1x128xbf16>
    %cst_48 = arith.constant dense<0.000000e+00> : vector<1x32xf32>
    %191 = tpu.matmul %190, %185, %cst_48 {dimension_numbers = #tpu.dot_dimension_numbers<[1], [1], [0], [0], [0, 0, 1, 0], [], []>} : vector<1x128xbf16>, vector<32x128xbf16>, vector<1x32xf32> -> vector<1x32xf32>
    %192 = vector.broadcast %189 : vector<32x1xf32> to vector<32x32xf32>
    %193 = vector.broadcast %191 : vector<1x32xf32> to vector<32x32xf32>
    %194 = arith.addf %192, %193 : vector<32x32xf32>
    %cst_49 = arith.constant 0.000000e+00 : f32
    %195 = vector.broadcast %cst_49 : f32 to vector<32x32xf32>
    %196 = arith.cmpf ogt, %194, %195 : vector<32x32xf32>
    %cst_50 = arith.constant 2.000000e-01 : f32
    %197 = vector.broadcast %cst_50 : f32 to vector<32x32xf32>
    %198 = arith.mulf %197, %194 : vector<32x32xf32>
    %199 = arith.select %196, %194, %198 : vector<32x32xi1>, vector<32x32xf32>
    %200 = arith.addf %199, %0 : vector<32x32xf32>
    %201 = math.exp %200 : vector<32x32xf32>
    %cst_51 = arith.constant dense<0.000000e+00> : vector<32xf32>
    %202 = vector.multi_reduction <add>, %201, %cst_51 [1] : vector<32x32xf32> to vector<32xf32>
    %203 = vector.shape_cast %202 : vector<32xf32> to vector<32x1xf32>
    %204 = tpu.reciprocal %203 {approx = true} : vector<32x1xf32> -> vector<32x1xf32>
    %205 = vector.broadcast %204 : vector<32x1xf32> to vector<32x32xf32>
    %206 = arith.mulf %201, %205 : vector<32x32xf32>
    %207 = arith.truncf %206 : vector<32x32xf32> to vector<32x32xbf16>
    %cst_52 = arith.constant dense<0.000000e+00> : vector<32x128xf32>
    %208 = tpu.matmul %207, %185, %cst_52 {dimension_numbers = #tpu.dot_dimension_numbers<[1], [0], [0], [1], [0, 0, 1, 1], [], []>} : vector<32x32xbf16>, vector<32x128xbf16>, vector<32x128xf32> -> vector<32x128xf32>
    %209 = vector.broadcast %11 : vector<1x128xf32> to vector<32x128xf32>
    %210 = arith.addf %208, %209 : vector<32x128xf32>
    %cst_53 = arith.constant 0.000000e+00 : f32
    %211 = vector.broadcast %cst_53 : f32 to vector<32x128xf32>
    %212 = arith.cmpf ogt, %210, %211 : vector<32x128xf32>
    %cst_54 = arith.constant 0.00999999977 : f32
    %213 = vector.broadcast %cst_54 : f32 to vector<32x128xf32>
    %214 = arith.mulf %213, %210 : vector<32x128xf32>
    %215 = arith.select %212, %210, %214 : vector<32x128xi1>, vector<32x128xf32>
    %216 = vector.broadcast %12 : vector<1x128xf32> to vector<32x128xf32>
    %217 = arith.mulf %216, %215 : vector<32x128xf32>
    %218 = vector.broadcast %13 : vector<1x128xf32> to vector<32x128xf32>
    %219 = arith.addf %217, %218 : vector<32x128xf32>
    %220 = arith.truncf %219 : vector<32x128xf32> to vector<32x128xbf16>
    %cst_55 = arith.constant dense<0.000000e+00> : vector<32x128xf32>
    %221 = tpu.matmul %220, %23, %cst_55 {dimension_numbers = #tpu.dot_dimension_numbers<[1], [0], [0], [1], [0, 0, 1, 1], [], []>} : vector<32x128xbf16>, vector<128x128xbf16>, vector<32x128xf32> -> vector<32x128xf32>
    %222 = arith.truncf %221 : vector<32x128xf32> to vector<32x128xbf16>
    %cst_56 = arith.constant dense<0.000000e+00> : vector<32x128xf32>
    %223 = tpu.matmul %2, %222, %cst_56 {dimension_numbers = #tpu.dot_dimension_numbers<[1], [0], [0], [1], [0, 0, 1, 1], [], []>} : vector<32x32xbf16>, vector<32x128xbf16>, vector<32x128xf32> -> vector<32x128xf32>
    %224 = vector.broadcast %14 : vector<1x128xf32> to vector<32x128xf32>
    %225 = arith.addf %223, %224 : vector<32x128xf32>
    %cst_57 = arith.constant 0.000000e+00 : f32
    %226 = vector.broadcast %cst_57 : f32 to vector<32x128xf32>
    %227 = arith.cmpf ogt, %225, %226 : vector<32x128xf32>
    %cst_58 = arith.constant 0.00999999977 : f32
    %228 = vector.broadcast %cst_58 : f32 to vector<32x128xf32>
    %229 = arith.mulf %228, %225 : vector<32x128xf32>
    %230 = arith.select %227, %225, %229 : vector<32x128xi1>, vector<32x128xf32>
    %231 = arith.truncf %230 : vector<32x128xf32> to vector<32x128xbf16>
    %cst_59 = arith.constant dense<0.000000e+00> : vector<8x128xf32>
    %232 = tpu.matmul %4, %231, %cst_59 {dimension_numbers = #tpu.dot_dimension_numbers<[1], [0], [0], [1], [0, 0, 1, 1], [], []>} : vector<8x32xbf16>, vector<32x128xbf16>, vector<8x128xf32> -> vector<8x128xf32>
    %233 = arith.truncf %232 : vector<8x128xf32> to vector<8x128xbf16>
    %cst_60 = arith.constant dense<0.000000e+00> : vector<8x128xf32>
    %234 = tpu.matmul %233, %24, %cst_60 {dimension_numbers = #tpu.dot_dimension_numbers<[1], [0], [0], [1], [0, 0, 1, 1], [], []>} : vector<8x128xbf16>, vector<128x128xbf16>, vector<8x128xf32> -> vector<8x128xf32>
    %235 = vector.broadcast %15 : vector<1x128xf32> to vector<8x128xf32>
    %236 = arith.addf %234, %235 : vector<8x128xf32>
    %237 = vector.broadcast %16 : vector<1x128xf32> to vector<8x128xf32>
    %238 = arith.mulf %237, %236 : vector<8x128xf32>
    %239 = vector.broadcast %17 : vector<1x128xf32> to vector<8x128xf32>
    %240 = arith.addf %238, %239 : vector<8x128xf32>
    %cst_61 = arith.constant 0.000000e+00 : f32
    %241 = vector.broadcast %cst_61 : f32 to vector<8x128xf32>
    %242 = arith.cmpf ogt, %240, %241 : vector<8x128xf32>
    %cst_62 = arith.constant 0.00999999977 : f32
    %243 = vector.broadcast %cst_62 : f32 to vector<8x128xf32>
    %244 = arith.mulf %243, %240 : vector<8x128xf32>
    %245 = arith.select %242, %240, %244 : vector<8x128xi1>, vector<8x128xf32>
    %246 = arith.truncf %245 : vector<8x128xf32> to vector<8x128xbf16>
    %cst_63 = arith.constant dense<0.000000e+00> : vector<8x128xf32>
    %247 = tpu.matmul %246, %25, %cst_63 {dimension_numbers = #tpu.dot_dimension_numbers<[1], [0], [0], [1], [0, 0, 1, 1], [], []>} : vector<8x128xbf16>, vector<128x128xbf16>, vector<8x128xf32> -> vector<8x128xf32>
    %248 = vector.broadcast %18 : vector<1x128xf32> to vector<8x128xf32>
    %249 = arith.addf %247, %248 : vector<8x128xf32>
    %c0_64 = arith.constant 0 : index
    %c0_65 = arith.constant 0 : index
    %250 = vector.load %arg6[%c0_64, %c0_65] : memref<8x128xf32, #tpu.memory_space<vmem>>, vector<8x128xf32>
    tpu.vector_store %arg6[%c0_64, %c0_65], %249 {strides = array<i32>} : memref<8x128xf32, #tpu.memory_space<vmem>>, vector<8x128xf32>,
    return
  }
  func.func @transform_0(%arg0: i32) -> (i32, i32) {
    %c0_i32 = arith.constant 0 : i32
    %c0_i32_0 = arith.constant 0 : i32
    %c0_i32_1 = arith.constant 0 : i32
    return %c0_i32, %c0_i32_0 : i32, i32
  }
  func.func @transform_1(%arg0: i32) -> (i32, i32) {
    %c0_i32 = arith.constant 0 : i32
    %c0_i32_0 = arith.constant 0 : i32
    %c0_i32_1 = arith.constant 0 : i32
    return %c0_i32, %c0_i32_0 : i32, i32
  }
  func.func @transform_2(%arg0: i32) -> (i32, i32) {
    %c0_i32 = arith.constant 0 : i32
    %c0_i32_0 = arith.constant 0 : i32
    %c0_i32_1 = arith.constant 0 : i32
    return %c0_i32, %c0_i32_0 : i32, i32
  }
  func.func @transform_3(%arg0: i32) -> (i32, i32) {
    %c0_i32 = arith.constant 0 : i32
    %c0_i32_0 = arith.constant 0 : i32
    %c0_i32_1 = arith.constant 0 : i32
    return %c0_i32, %c0_i32_0 : i32, i32
  }
  func.func @transform_4(%arg0: i32) -> (i32, i32) {
    %c0_i32 = arith.constant 0 : i32
    %c0_i32_0 = arith.constant 0 : i32
    %c0_i32_1 = arith.constant 0 : i32
    return %c0_i32, %c0_i32_0 : i32, i32
  }
  func.func @transform_5(%arg0: i32) -> (i32, i32) {
    %c0_i32 = arith.constant 0 : i32
    %c0_i32_0 = arith.constant 0 : i32
    %c0_i32_1 = arith.constant 0 : i32
    return %c0_i32, %c0_i32_0 : i32, i32
  }
}

</mosaic_0001>

<llo_original>
// kernel: m2_forward.1
$region0: #{m2_forward.1}
  #allocation0 [shape = 'u32[]', space=smem, size = 0x4, offset = 0x4, fixed_abs, tag = 'smem constant byte address 0x4 - core index']
  #allocation1 [shape = 'u32[144,128]{1,0:T(1,128)}', space=vmem, size = 0x12000, scoped, tag = 'internal scratch']
  %s0 = inlined_call_operand.vmem [shape: f32[32,16], index: 0, kind: input, shape index: {}]
  %s1 = inlined_call_operand.vmem [shape: f32[72,32], index: 1, kind: input, shape index: {}]
  %s2 = inlined_call_operand.vmem [shape: f32[16,256], index: 2, kind: input, shape index: {}]
  %s3 = inlined_call_operand.vmem [shape: bf16[24,256], index: 3, kind: input, shape index: {}]
  %s4 = inlined_call_operand.hbm [shape: bf16[896,128], index: 4, kind: input, shape index: {}]
  %s5 = inlined_call_operand.vmem [shape: f32[8,128], index: 5, kind: output, shape index: {}]
  %s6 = sld [smem:[#allocation0]]
  $region34: #{m2_forward.1} parent=0
    _
  %s8 = ssub.s32 1, %s6
  %s9 = scalar_select 0, %s8, %s6
  $region1: #{m2_forward.1} parent=0
    #allocation2 [shape = 'u8[229376]{0}', space=vmem, size = 0x38000, scoped, tag = 'input window, operand 4, single buffered']
    #allocation3 [shape = 's32[1]{0}', space=sflag, size = 0x4, scoped, tag = 'scoped memory for m2_forward.1']
    %10 = vsyncpa [#allocation3], 0
    // Predicated region
    $region2: #{m2_forward.1} parent=1 // pred_check
      _
    $region3: #{m2_forward.1} parent=1 // pred_check_branch
      %12 = sbr.rel (0) target = $region5
    $region4: #{m2_forward.1} parent=1 // pred_region
      _
    $region5: #{m2_forward.1} parent=1 // pred_fallthru
      _
    // Predicated region
    $region6: #{m2_forward.1} parent=1 // pred_check
      _
    $region7: #{m2_forward.1} parent=1 // pred_check_branch
      %14 = sbr.rel (0) target = $region9
    $region8: #{m2_forward.1} parent=1 // pred_region
      _
    $region9: #{m2_forward.1} parent=1 // pred_fallthru
      _
    // Predicated region
    $region10: #{m2_forward.1} parent=1 // pred_check
      _
    $region11: #{m2_forward.1} parent=1 // pred_check_branch
      %16 = sbr.rel (0) target = $region13
    $region12: #{m2_forward.1} parent=1 // pred_region
      _
    $region13: #{m2_forward.1} parent=1 // pred_fallthru
      _
    // Predicated region
    $region14: #{m2_forward.1} parent=1 // pred_check
      _
    $region15: #{m2_forward.1} parent=1 // pred_check_branch
      %18 = sbr.rel (0) target = $region17
    $region16: #{m2_forward.1} parent=1 // pred_region
      _
    $region17: #{m2_forward.1} parent=1 // pred_fallthru
      _
    // Predicated region
    $region18: #{m2_forward.1} parent=1 // pred_check
      _
    $region19: #{m2_forward.1} parent=1 // pred_check_branch
      %20 = sbr.rel (0) target = $region21
    $region20: #{m2_forward.1} parent=1 // pred_region
      %s22 = ssub.s32 7168, 7168
      %23 = vsyncadd [#allocation3], %s22
      %s24 = sshll.u32 [#allocation2], 4
      %s25 = int_to_ptr.vmem [resolvable:$true] %s24
      %30 = dma.hbm_to_vmem [thread:$0]  %s4, 7168, %s25, [#allocation3], 64, 64, 4
    $region21: #{m2_forward.1} parent=1 // pred_fallthru
      _
    // Predicated region
    $region22: #{m2_forward.1} parent=1 // pred_check
      _
    $region23: #{m2_forward.1} parent=1 // pred_check_branch
      %32 = sbr.rel (0) target = $region25
    $region24: #{m2_forward.1} parent=1 // pred_region
      %33 = dma.done [#allocation3], 7168
    $region25: #{m2_forward.1} parent=1 // pred_fallthru
      _
    %v35 = vld [vmem:[%s1] sm:$0xff]
    %v36 = vld [vmem:[%s1 + $0x8] sm:$0xff]
    %v37 = vld [vmem:[%s1 + $0x10] sm:$0xff]
    %v38 = vld [vmem:[%s1 + $0x18] sm:$0xff]
    %v39 = vld [vmem:[%s1 + $0x20] sm:$0xff]
    %v40 = vld [vmem:[%s1 + $0x28] sm:$0xff]
    %v41 = vld [vmem:[%s1 + $0x30] sm:$0xff]
    %v42 = vld [vmem:[%s1 + $0x38] sm:$0xff]
    %v43 = vpack.c.bf16 %v40, %v39
    %v44 = vpack.c.bf16 %v42, %v41
    %v45 = vld [vmem:[%s1 + $0x40] sm:$0xff]
    %v46 = vpack.c.bf16 %v45, %v45
    %v47 = vld [vmem:[%s2] sm:$0xff]
    %v48 = vld [vmem:[%s2 + $0x8] sm:$0xff]
    %v49 = vld [vmem:[%s2 + $0x10] sm:$0xff]
    %v50 = vld [vmem:[%s3] sm:$0xff]
    %v51 = vld [vmem:[%s3 + $0x8] sm:$0xff]
    %v52 = vld [vmem:[%s3 + $0x10] sm:$0x33]
    %v53 = vld [vmem:[#allocation2] sm:$0xf]
    %v54 = vld [vmem:[#allocation2 + $0x4] sm:$0xf]
    %v55 = vld [vmem:[#allocation2 + $0x8] sm:$0xf]
    %v56 = vld [vmem:[#allocation2 + $0xc] sm:$0xf]
    %v57 = vld [vmem:[#allocation2 + $0x10] sm:$0xf]
    %v58 = vld [vmem:[#allocation2 + $0x14] sm:$0xf]
    %v59 = vld [vmem:[#allocation2 + $0x18] sm:$0xf]
    %v60 = vld [vmem:[#allocation2 + $0x1c] sm:$0xf]
    %v61 = vld [vmem:[#allocation2 + $0x20] sm:$0xf]
    %v62 = vld [vmem:[#allocation2 + $0x24] sm:$0xf]
    %v63 = vld [vmem:[#allocation2 + $0x28] sm:$0xf]
    %v64 = vld [vmem:[#allocation2 + $0x2c] sm:$0xf]
    %v65 = vld [vmem:[#allocation2 + $0x30] sm:$0xf]
    %v66 = vld [vmem:[#allocation2 + $0x34] sm:$0xf]
    %v67 = vld [vmem:[#allocation2 + $0x38] sm:$0xf]
    %v68 = vld [vmem:[#allocation2 + $0x3c] sm:$0xf]
    %v69 = vld [vmem:[#allocation2 + $0x40] sm:$0xf]
    %v70 = vld [vmem:[#allocation2 + $0x44] sm:$0xf]
    %v71 = vld [vmem:[#allocation2 + $0x48] sm:$0xf]
    %v72 = vld [vmem:[#allocation2 + $0x4c] sm:$0xf]
    %v73 = vld [vmem:[#allocation2 + $0x50] sm:$0xf]
    %v74 = vld [vmem:[#allocation2 + $0x54] sm:$0xf]
    %v75 = vld [vmem:[#allocation2 + $0x58] sm:$0xf]
    %v76 = vld [vmem:[#allocation2 + $0x5c] sm:$0xf]
    %v77 = vld [vmem:[#allocation2 + $0x60] sm:$0xf]
    %v78 = vld [vmem:[#allocation2 + $0x64] sm:$0xf]
    %v79 = vld [vmem:[#allocation2 + $0x68] sm:$0xf]
    %v80 = vld [vmem:[#allocation2 + $0x6c] sm:$0xf]
    %v81 = vld [vmem:[#allocation2 + $0x70] sm:$0xf]
    %v82 = vld [vmem:[#allocation2 + $0x74] sm:$0xf]
    %v83 = vld [vmem:[#allocation2 + $0x78] sm:$0xf]
    %v84 = vld [vmem:[#allocation2 + $0x7c] sm:$0xf]
    %v85 = vld [vmem:[#allocation2 + $0x80] sm:$0xf]
    %v86 = vld [vmem:[#allocation2 + $0x84] sm:$0xf]
    %v87 = vld [vmem:[#allocation2 + $0x88] sm:$0xf]
    %v88 = vld [vmem:[#allocation2 + $0x8c] sm:$0xf]
    %v89 = vld [vmem:[#allocation2 + $0x90] sm:$0xf]
    %v90 = vld [vmem:[#allocation2 + $0x94] sm:$0xf]
    %v91 = vld [vmem:[#allocation2 + $0x98] sm:$0xf]
    %v92 = vld [vmem:[#allocation2 + $0x9c] sm:$0xf]
    %v93 = vld [vmem:[#allocation2 + $0xa0] sm:$0xf]
    %v94 = vld [vmem:[#allocation2 + $0xa4] sm:$0xf]
    %v95 = vld [vmem:[#allocation2 + $0xa8] sm:$0xf]
    %v96 = vld [vmem:[#allocation2 + $0xac] sm:$0xf]
    %v97 = vld [vmem:[#allocation2 + $0xb0] sm:$0xf]
    %v98 = vld [vmem:[#allocation2 + $0xb4] sm:$0xf]
    %v99 = vld [vmem:[#allocation2 + $0xb8] sm:$0xf]
    %v100 = vld [vmem:[#allocation2 + $0xbc] sm:$0xf]
    %v101 = vld [vmem:[#allocation2 + $0xc0] sm:$0xf]
    %v102 = vld [vmem:[#allocation2 + $0xc4] sm:$0xf]
    %v103 = vld [vmem:[#allocation2 + $0xc8] sm:$0xf]
    %v104 = vld [vmem:[#allocation2 + $0xcc] sm:$0xf]
    %v105 = vld [vmem:[#allocation2 + $0xd0] sm:$0xf]
    %v106 = vld [vmem:[#allocation2 + $0xd4] sm:$0xf]
    %v107 = vld [vmem:[#allocation2 + $0xd8] sm:$0xf]
    %v108 = vld [vmem:[#allocation2 + $0xdc] sm:$0xf]
    %v109 = vld [vmem:[#allocation2 + $0xe0] sm:$0xf]
    %v110 = vld [vmem:[#allocation2 + $0xe4] sm:$0xf]
    %v111 = vld [vmem:[#allocation2 + $0xe8] sm:$0xf]
    %v112 = vld [vmem:[#allocation2 + $0xec] sm:$0xf]
    %v113 = vld [vmem:[#allocation2 + $0xf0] sm:$0xf]
    %v114 = vld [vmem:[#allocation2 + $0xf4] sm:$0xf]
    %v115 = vld [vmem:[#allocation2 + $0xf8] sm:$0xf]
    %v116 = vld [vmem:[#allocation2 + $0xfc] sm:$0xf]
    %v117 = vld [vmem:[#allocation2 + $0x100] sm:$0xf]
    %v118 = vld [vmem:[#allocation2 + $0x104] sm:$0xf]
    %v119 = vld [vmem:[#allocation2 + $0x108] sm:$0xf]
    %v120 = vld [vmem:[#allocation2 + $0x10c] sm:$0xf]
    %v121 = vld [vmem:[#allocation2 + $0x110] sm:$0xf]
    %v122 = vld [vmem:[#allocation2 + $0x114] sm:$0xf]
    %v123 = vld [vmem:[#allocation2 + $0x118] sm:$0xf]
    %v124 = vld [vmem:[#allocation2 + $0x11c] sm:$0xf]
    %v125 = vld [vmem:[#allocation2 + $0x120] sm:$0xf]
    %v126 = vld [vmem:[#allocation2 + $0x124] sm:$0xf]
    %v127 = vld [vmem:[#allocation2 + $0x128] sm:$0xf]
    %v128 = vld [vmem:[#allocation2 + $0x12c] sm:$0xf]
    %v129 = vld [vmem:[#allocation2 + $0x130] sm:$0xf]
    %v130 = vld [vmem:[#allocation2 + $0x134] sm:$0xf]
    %v131 = vld [vmem:[#allocation2 + $0x138] sm:$0xf]
    %v132 = vld [vmem:[#allocation2 + $0x13c] sm:$0xf]
    %v133 = vld [vmem:[#allocation2 + $0x140] sm:$0xf]
    %v134 = vld [vmem:[#allocation2 + $0x144] sm:$0xf]
    %v135 = vld [vmem:[#allocation2 + $0x148] sm:$0xf]
    %v136 = vld [vmem:[#allocation2 + $0x14c] sm:$0xf]
    %v137 = vld [vmem:[#allocation2 + $0x150] sm:$0xf]
    %v138 = vld [vmem:[#allocation2 + $0x154] sm:$0xf]
    %v139 = vld [vmem:[#allocation2 + $0x158] sm:$0xf]
    %v140 = vld [vmem:[#allocation2 + $0x15c] sm:$0xf]
    %v141 = vld [vmem:[#allocation2 + $0x160] sm:$0xf]
    %v142 = vld [vmem:[#allocation2 + $0x164] sm:$0xf]
    %v143 = vld [vmem:[#allocation2 + $0x168] sm:$0xf]
    %v144 = vld [vmem:[#allocation2 + $0x16c] sm:$0xf]
    %v145 = vld [vmem:[#allocation2 + $0x170] sm:$0xf]
    %v146 = vld [vmem:[#allocation2 + $0x174] sm:$0xf]
    %v147 = vld [vmem:[#allocation2 + $0x178] sm:$0xf]
    %v148 = vld [vmem:[#allocation2 + $0x17c] sm:$0xf]
    %v149 = vld [vmem:[#allocation2 + $0x180] sm:$0xf]
    %v150 = vld [vmem:[#allocation2 + $0x184] sm:$0xf]
    %v151 = vld [vmem:[#allocation2 + $0x188] sm:$0xf]
    %v152 = vld [vmem:[#allocation2 + $0x18c] sm:$0xf]
    %v153 = vld [vmem:[#allocation2 + $0x190] sm:$0xf]
    %v154 = vld [vmem:[#allocation2 + $0x194] sm:$0xf]
    %v155 = vld [vmem:[#allocation2 + $0x198] sm:$0xf]
    %v156 = vld [vmem:[#allocation2 + $0x19c] sm:$0xf]
    %v157 = vld [vmem:[#allocation2 + $0x1a0] sm:$0xf]
    %v158 = vld [vmem:[#allocation2 + $0x1a4] sm:$0xf]
    %v159 = vld [vmem:[#allocation2 + $0x1a8] sm:$0xf]
    %v160 = vld [vmem:[#allocation2 + $0x1ac] sm:$0xf]
    %v161 = vld [vmem:[#allocation2 + $0x1b0] sm:$0xf]
    %v162 = vld [vmem:[#allocation2 + $0x1b4] sm:$0xf]
    %v163 = vld [vmem:[#allocation2 + $0x1b8] sm:$0xf]
    %v164 = vld [vmem:[#allocation2 + $0x1bc] sm:$0xf]
    %v165 = vld [vmem:[%s0] sm:$0xff]
    %v166 = vld [vmem:[%s0 + $0x8] sm:$0xff]
    %v167 = vld [vmem:[%s0 + $0x10] sm:$0xff]
    %v168 = vld [vmem:[%s0 + $0x18] sm:$0xff]
    %v169 = vpack.c.bf16 %v166, %v165
    %v170 = vpack.c.bf16 %v168, %v167
    %v173 = vunpack.c.l.b16 %v50
    %v174 = vunpack.c.h.b16 %v50
    %v175 = vunpack.c.l.b16 %v51
    %v176 = vunpack.c.h.b16 %v51
    %v177 = vpack.c.b16 %v175, %v173
    %v178 = vpack.c.b16 %v176, %v174
    %vm181 = vcmask 130048
    %v183 = vsel %vm181, %v169, 0
    %v186 = vsel %vm181, %v170, 0
    %188 = vmatprep.subr.bf16.mxu0 %v178
    %189 = vmatpush1.bf16.msra.mxu0 %v177
    %190 = vmatprep.subr.bf16.mxu0 0
    %191 = vmatpush1.bf16.msra.mxu0 0
    %192 = vmatprep.subr.bf16.mxu0 0
    %193 = vmatpush1.bf16.msra.mxu0 0
    %194 = vmatprep.subr.bf16.mxu0 0
    %195 = vmatpush1.bf16.msra.mxu0 0
    %196 = vmatprep.subr.bf16.mxu0 0
    %197 = vmatpush1.bf16.msra.mxu0 0
    %198 = vmatprep.subr.bf16.mxu0 0
    %199 = vmatpush1.bf16.msra.mxu0 0
    %200 = vmatprep.subr.bf16.mxu0 0
    %201 = vmatpush1.bf16.msra.mxu0 0
    %202 = vmatprep.subr.bf16.mxu0 0
    %203 = vmatpush1.bf16.msra.mxu0 0
    %204 = vmatprep.subr.bf16.mxu0 0
    %205 = vmatpush1.bf16.msra.mxu0 0
    %206 = vmatprep.subr.bf16.mxu0 0
    %207 = vmatpush1.bf16.msra.mxu0 0
    %208 = vmatprep.subr.bf16.mxu0 0
    %209 = vmatpush1.bf16.msra.mxu0 0
    %210 = vmatprep.subr.bf16.mxu0 0
    %211 = vmatpush1.bf16.msra.mxu0 0
    %212 = vmatprep.subr.bf16.mxu0 0
    %213 = vmatpush1.bf16.msra.mxu0 0
    %214 = vmatprep.subr.bf16.mxu0 0
    %215 = vmatpush1.bf16.msra.mxu0 0
    %216 = vmatprep.subr.bf16.mxu0 0
    %217 = vmatpush1.bf16.msra.mxu0 0
    %218 = vmatprep.subr.bf16.mxu0 0
    %219 = vmatpush1.bf16.msra.mxu0 0
    %220 = vmatprep.mubr.bf16.mxu0 0
    %221 = vmatmul.mubr.bf16.gmra.mrb[0].mxu0 %v183
    %v222 = vpop.f32.mrb[0].mxu0
    %v223 = vadd.f32 0.0, %v222
    %v224 = vpop.f32.mrb[0].mxu0
    %v225 = vadd.f32 0.0, %v224
    %v226 = vpop.f32.mrb[0].mxu0
    %v227 = vadd.f32 0.0, %v226
    %v228 = vpop.f32.mrb[0].mxu0
    %v229 = vadd.f32 0.0, %v228
    %230 = vmatprep.mubr.bf16.mxu0 0
    %231 = vmatmul.mubr.bf16.gmra.mrb[0].mxu0 %v186
    %v232 = vpop.f32.mrb[0].mxu0
    %v233 = vadd.f32 0.0, %v232
    %v234 = vpop.f32.mrb[0].mxu0
    %v235 = vadd.f32 0.0, %v234
    %v236 = vpop.f32.mrb[0].mxu0
    %v237 = vadd.f32 0.0, %v236
    %v238 = vpop.f32.mrb[0].mxu0
    %v239 = vadd.f32 0.0, %v238
    %240 = vdwg.mxu0
    %v241 = vpack.c.bf16 %v227, %v223
    %v242 = vpack.c.bf16 %v229, %v225
    %v243 = vpack.c.bf16 %v237, %v233
    %v244 = vpack.c.bf16 %v239, %v235
    %v277 = vunpack.c.l.b16 %v53
    %v278 = vunpack.c.l.b16 %v54
    %v279 = vunpack.c.l.b16 %v55
    %v280 = vunpack.c.l.b16 %v56
    %v281 = vunpack.c.l.b16 %v57
    %v282 = vunpack.c.l.b16 %v58
    %v283 = vunpack.c.l.b16 %v59
    %v284 = vunpack.c.l.b16 %v60
    %v285 = vunpack.c.l.b16 %v61
    %v286 = vunpack.c.l.b16 %v62
    %v287 = vunpack.c.l.b16 %v63
    %v288 = vunpack.c.l.b16 %v64
    %v289 = vunpack.c.l.b16 %v65
    %v290 = vunpack.c.l.b16 %v66
    %v291 = vunpack.c.l.b16 %v67
    %v292 = vunpack.c.l.b16 %v68
    %v293 = vunpack.c.l.b16 %v69
    %v294 = vunpack.c.l.b16 %v70
    %v295 = vunpack.c.l.b16 %v71
    %v296 = vunpack.c.l.b16 %v72
    %v297 = vunpack.c.l.b16 %v73
    %v298 = vunpack.c.l.b16 %v74
    %v299 = vunpack.c.l.b16 %v75
    %v300 = vunpack.c.l.b16 %v76
    %v301 = vunpack.c.l.b16 %v77
    %v302 = vunpack.c.l.b16 %v78
    %v303 = vunpack.c.l.b16 %v79
    %v304 = vunpack.c.l.b16 %v80
    %v305 = vunpack.c.l.b16 %v81
    %v306 = vunpack.c.l.b16 %v82
    %v307 = vunpack.c.l.b16 %v83
    %v308 = vunpack.c.l.b16 %v84
    %v309 = vpack.c.b16 %v278, %v277
    %v310 = vpack.c.b16 %v280, %v279
    %v311 = vpack.c.b16 %v282, %v281
    %v312 = vpack.c.b16 %v284, %v283
    %v313 = vpack.c.b16 %v286, %v285
    %v314 = vpack.c.b16 %v288, %v287
    %v315 = vpack.c.b16 %v290, %v289
    %v316 = vpack.c.b16 %v292, %v291
    %v317 = vpack.c.b16 %v294, %v293
    %v318 = vpack.c.b16 %v296, %v295
    %v319 = vpack.c.b16 %v298, %v297
    %v320 = vpack.c.b16 %v300, %v299
    %v321 = vpack.c.b16 %v302, %v301
    %v322 = vpack.c.b16 %v304, %v303
    %v323 = vpack.c.b16 %v306, %v305
    %v324 = vpack.c.b16 %v308, %v307
    %341 = vmatprep.subr.bf16.mxu0 0
    %342 = vmatpush1.bf16.msra.mxu0 %v309
    %343 = vmatprep.subr.bf16.mxu0 0
    %344 = vmatpush1.bf16.msra.mxu0 %v310
    %345 = vmatprep.subr.bf16.mxu0 0
    %346 = vmatpush1.bf16.msra.mxu0 %v311
    %347 = vmatprep.subr.bf16.mxu0 0
    %348 = vmatpush1.bf16.msra.mxu0 %v312
    %349 = vmatprep.subr.bf16.mxu0 0
    %350 = vmatpush1.bf16.msra.mxu0 %v313
    %351 = vmatprep.subr.bf16.mxu0 0
    %352 = vmatpush1.bf16.msra.mxu0 %v314
    %353 = vmatprep.subr.bf16.mxu0 0
    %354 = vmatpush1.bf16.msra.mxu0 %v315
    %355 = vmatprep.subr.bf16.mxu0 0
    %356 = vmatpush1.bf16.msra.mxu0 %v316
    %357 = vmatprep.subr.bf16.mxu0 0
    %358 = vmatpush1.bf16.msra.mxu0 %v317
    %359 = vmatprep.subr.bf16.mxu0 0
    %360 = vmatpush1.bf16.msra.mxu0 %v318
    %361 = vmatprep.subr.bf16.mxu0 0
    %362 = vmatpush1.bf16.msra.mxu0 %v319
    %363 = vmatprep.subr.bf16.mxu0 0
    %364 = vmatpush1.bf16.msra.mxu0 %v320
    %365 = vmatprep.subr.bf16.mxu0 0
    %366 = vmatpush1.bf16.msra.mxu0 %v321
    %367 = vmatprep.subr.bf16.mxu0 0
    %368 = vmatpush1.bf16.msra.mxu0 %v322
    %369 = vmatprep.subr.bf16.mxu0 0
    %370 = vmatpush1.bf16.msra.mxu0 %v323
    %371 = vmatprep.subr.bf16.mxu0 0
    %372 = vmatpush1.bf16.msra.mxu0 %v324
    %373 = vmatprep.mubr.bf16.mxu0 %v242
    %374 = vmatmul.mubr.bf16.gmra.mrb[0].mxu0 %v241
    %v375 = vpop.f32.mrb[0].mxu0
    %v376 = vadd.f32 0.0, %v375
    %v377 = vpop.f32.mrb[0].mxu0
    %v378 = vpop.f32.mrb[0].mxu0
    %v379 = vadd.f32 0.0, %v378
    %v380 = vpop.f32.mrb[0].mxu0
    %381 = vmatprep.mubr.bf16.mxu0 %v244
    %382 = vmatmul.mubr.bf16.gmra.mrb[0].mxu0 %v243
    %v383 = vpop.f32.mrb[0].mxu0
    %v384 = vadd.f32 0.0, %v383
    %v385 = vpop.f32.mrb[0].mxu0
    %v386 = vpop.f32.mrb[0].mxu0
    %v387 = vadd.f32 0.0, %v386
    %v388 = vpop.f32.mrb[0].mxu0
    %389 = vdwg.mxu0
    %v391 = vunpack.c.l.b16 %v52
    %v392 = vunpack.c.h.b16 %v52
    %v393 = vpack.c.b16 %v391, %v391
    %v394 = vpack.c.b16 %v392, %v392
    %397 = vmatprep.subr.bf16.mxu0 %v242
    %398 = vmatpush1.bf16.xpose.msra.mxu0 %v241
    %399 = vmatprep.subr.bf16.mxu0 %v244
    %400 = vmatpush1.bf16.xpose.msra.mxu0 %v243
    %401 = vmatprep.subr.bf16.mxu0 0
    %402 = vmatpush1.bf16.xpose.msra.mxu0 0
    %403 = vmatprep.subr.bf16.mxu0 0
    %404 = vmatpush1.bf16.xpose.msra.mxu0 0
    %405 = vmatprep.subr.bf16.mxu0 0
    %406 = vmatpush1.bf16.xpose.msra.mxu0 0
    %407 = vmatprep.subr.bf16.mxu0 0
    %408 = vmatpush1.bf16.xpose.msra.mxu0 0
    %409 = vmatprep.subr.bf16.mxu0 0
    %410 = vmatpush1.bf16.xpose.msra.mxu0 0
    %411 = vmatprep.subr.bf16.mxu0 0
    %412 = vmatpush1.bf16.xpose.msra.mxu0 0
    %413 = vmatprep.subr.bf16.mxu0 0
    %414 = vmatpush1.bf16.xpose.msra.mxu0 0
    %415 = vmatprep.subr.bf16.mxu0 0
    %416 = vmatpush1.bf16.xpose.msra.mxu0 0
    %417 = vmatprep.subr.bf16.mxu0 0
    %418 = vmatpush1.bf16.xpose.msra.mxu0 0
    %419 = vmatprep.subr.bf16.mxu0 0
    %420 = vmatpush1.bf16.xpose.msra.mxu0 0
    %421 = vmatprep.subr.bf16.mxu0 0
    %422 = vmatpush1.bf16.xpose.msra.mxu0 0
    %423 = vmatprep.subr.bf16.mxu0 0
    %424 = vmatpush1.bf16.xpose.msra.mxu0 0
    %425 = vmatprep.subr.bf16.mxu0 0
    %426 = vmatpush1.bf16.xpose.msra.mxu0 0
    %427 = vmatprep.subr.bf16.mxu0 0
    %428 = vmatpush1.bf16.xpose.msra.mxu0 0
    %429 = vmatprep.mubr.bf16.mxu0 %v394
    %430 = vmatmul.mubr.bf16.gmra.mrb[0].mxu0 %v393
    %v431 = vpop.f32.mrb[0].mxu0
    %v432 = vadd.f32 0.0, %v431
    %v433 = vpop.f32.mrb[0].mxu0
    %v434 = vpop.f32.mrb[0].mxu0
    %v435 = vpop.f32.mrb[0].mxu0
    %436 = vdwg.mxu0
    %438 = vset.pattern.permute.xlu0 0
    %439 = vperm.xlu0 %438, %v376
    %v440 = vpop.permute.xlu0 %439
    %443 = vset.pattern.permute.xlu0 0
    %444 = vperm.xlu0 %443, %v379
    %v445 = vpop.permute.xlu0 %444
    %448 = vset.pattern.permute.xlu0 0
    %449 = vperm.xlu0 %448, %v384
    %v450 = vpop.permute.xlu0 %449
    %453 = vset.pattern.permute.xlu0 0
    %454 = vperm.xlu0 %453, %v387
    %v455 = vpop.permute.xlu0 %454
    %v457 = vlaneseq
    %v458 = vshrl.u32 %v457, 7
    %v459 = vsub.s32 0, %v458
    %v460 = vrot.slane %v432, %v459
    %v461 = vadd.f32 %v440, %v460
    %v462 = vadd.f32 %v445, %v460
    %v463 = vadd.f32 %v450, %v460
    %v464 = vadd.f32 %v455, %v460
    %vm465 = vcmp.gt.f32.partialorder %v461, 0.0
    %vm466 = vcmp.gt.f32.partialorder %v462, 0.0
    %vm467 = vcmp.gt.f32.partialorder %v463, 0.0
    %vm468 = vcmp.gt.f32.partialorder %v464, 0.0
    %v469 = vmul.f32 %v461, 0.2
    %v470 = vmul.f32 %v462, 0.2
    %v471 = vmul.f32 %v463, 0.2
    %v472 = vmul.f32 %v464, 0.2
    %v473 = vsel %vm465, %v461, %v469
    %v474 = vsel %vm466, %v462, %v470
    %v475 = vsel %vm467, %v463, %v471
    %v476 = vsel %vm468, %v464, %v472
    %v477 = vadd.f32 %v473, %v35
    %v478 = vadd.f32 %v474, %v36
    %v479 = vadd.f32 %v475, %v37
    %v480 = vadd.f32 %v476, %v38
    %v481 = vmul.f32 %v477, 1.442695
    %v482 = vpow.pop %v481
    %v483 = vmul.f32 %v478, 1.442695
    %v484 = vpow.pop %v483
    %v485 = vmul.f32 %v479, 1.442695
    %v486 = vpow.pop %v485
    %v487 = vmul.f32 %v480, 1.442695
    %v488 = vpow.pop %v487
    %vm489 = vcmask 261120
    %v490 = vsel %vm489, %v482, 0.0
    %491 = vadd.xlane.f32.xlu0 %v490
    %v492 = vpop.xlane.xlu0 %491
    %v493 = vsel %vm489, %v484, 0.0
    %494 = vadd.xlane.f32.xlu0 %v493
    %v495 = vpop.xlane.xlu0 %494
    %v496 = vsel %vm489, %v486, 0.0
    %497 = vadd.xlane.f32.xlu0 %v496
    %v498 = vpop.xlane.xlu0 %497
    %v499 = vsel %vm489, %v488, 0.0
    %500 = vadd.xlane.f32.xlu0 %v499
    %v501 = vpop.xlane.xlu0 %500
    %v502 = vrcp.pop %v492
    %v503 = vrcp.pop %v495
    %v504 = vrcp.pop %v498
    %v505 = vrcp.pop %v501
    %v506 = vmul.f32 %v482, %v502
    %v507 = vmul.f32 %v484, %v503
    %v508 = vmul.f32 %v486, %v504
    %v509 = vmul.f32 %v488, %v505
    %v510 = vpack.c.bf16 %v507, %v506
    %v511 = vpack.c.bf16 %v509, %v508
    %v512 = vlaneseq
    %v513 = vshrl.u32 %v512, 7
    %v514 = vsub.s32 0, %v513
    %v515 = vrot.slane %v47, %v514
    %v517 = vsel %vm489, %v510, 0
    %v520 = vsel %vm489, %v511, 0
    %522 = vmatprep.subr.bf16.mxu0 0
    %523 = vmatpush1.bf16.msra.mxu0 %v241
    %524 = vmatprep.subr.bf16.mxu0 0
    %525 = vmatpush1.bf16.msra.mxu0 %v243
    %526 = vmatprep.subr.bf16.mxu0 0
    %527 = vmatpush1.bf16.msra.mxu0 0
    %528 = vmatprep.subr.bf16.mxu0 0
    %529 = vmatpush1.bf16.msra.mxu0 0
    %530 = vmatprep.subr.bf16.mxu0 0
    %531 = vmatpush1.bf16.msra.mxu0 0
    %532 = vmatprep.subr.bf16.mxu0 0
    %533 = vmatpush1.bf16.msra.mxu0 0
    %534 = vmatprep.subr.bf16.mxu0 0
    %535 = vmatpush1.bf16.msra.mxu0 0
    %536 = vmatprep.subr.bf16.mxu0 0
    %537 = vmatpush1.bf16.msra.mxu0 0
    %538 = vmatprep.subr.bf16.mxu0 0
    %539 = vmatpush1.bf16.msra.mxu0 0
    %540 = vmatprep.subr.bf16.mxu0 0
    %541 = vmatpush1.bf16.msra.mxu0 0
    %542 = vmatprep.subr.bf16.mxu0 0
    %543 = vmatpush1.bf16.msra.mxu0 0
    %544 = vmatprep.subr.bf16.mxu0 0
    %545 = vmatpush1.bf16.msra.mxu0 0
    %546 = vmatprep.subr.bf16.mxu0 0
    %547 = vmatpush1.bf16.msra.mxu0 0
    %548 = vmatprep.subr.bf16.mxu0 0
    %549 = vmatpush1.bf16.msra.mxu0 0
    %550 = vmatprep.subr.bf16.mxu0 0
    %551 = vmatpush1.bf16.msra.mxu0 0
    %552 = vmatprep.subr.bf16.mxu0 0
    %553 = vmatpush1.bf16.msra.mxu0 0
    %554 = vmatprep.mubr.bf16.mxu0 0
    %555 = vmatmul.mubr.bf16.gmra.mrb[0].mxu0 %v517
    %v556 = vpop.f32.mrb[0].mxu0
    %v557 = vadd.f32 %v515, %v556
    %v558 = vpop.f32.mrb[0].mxu0
    %v559 = vpop.f32.mrb[0].mxu0
    %v560 = vadd.f32 %v515, %v559
    %v561 = vpop.f32.mrb[0].mxu0
    %562 = vmatprep.mubr.bf16.mxu0 0
    %563 = vmatmul.mubr.bf16.gmra.mrb[0].mxu0 %v520
    %v564 = vpop.f32.mrb[0].mxu0
    %v565 = vadd.f32 %v515, %v564
    %v566 = vpop.f32.mrb[0].mxu0
    %v567 = vpop.f32.mrb[0].mxu0
    %v568 = vadd.f32 %v515, %v567
    %v569 = vpop.f32.mrb[0].mxu0
    %570 = vdwg.mxu0
    %vm571 = vcmp.gt.f32.partialorder %v557, 0.0
    %vm572 = vcmp.gt.f32.partialorder %v560, 0.0
    %vm573 = vcmp.gt.f32.partialorder %v565, 0.0
    %vm574 = vcmp.gt.f32.partialorder %v568, 0.0
    %v575 = vmul.f32 %v557, 0.01
    %v576 = vmul.f32 %v560, 0.01
    %v577 = vmul.f32 %v565, 0.01
    %v578 = vmul.f32 %v568, 0.01
    %v579 = vsel %vm571, %v557, %v575
    %v580 = vsel %vm572, %v560, %v576
    %v581 = vsel %vm573, %v565, %v577
    %v582 = vsel %vm574, %v568, %v578
    %v583 = vlaneseq
    %v584 = vshrl.u32 %v583, 7
    %v585 = vsub.s32 1, %v584
    %v586 = vrot.slane %v47, %v585
    %v587 = vmul.f32 %v586, %v579
    %v588 = vmul.f32 %v586, %v580
    %v589 = vmul.f32 %v586, %v581
    %v590 = vmul.f32 %v586, %v582
    %v591 = vlaneseq
    %v592 = vshrl.u32 %v591, 7
    %v593 = vsub.s32 2, %v592
    %v594 = vrot.slane %v47, %v593
    %v595 = vadd.f32 %v587, %v594
    %v596 = vadd.f32 %v588, %v594
    %v597 = vadd.f32 %v589, %v594
    %v598 = vadd.f32 %v590, %v594
    %v599 = vpack.c.bf16 %v596, %v595
    %v600 = vpack.c.bf16 %v598, %v597
    %601 = vset.pattern.permute.xlu0 1
    %602 = vperm.xlu0 %601, %v376
    %v603 = vpop.permute.xlu0 %602
    %605 = vset.pattern.permute.xlu0 1
    %606 = vperm.xlu0 %605, %v379
    %v607 = vpop.permute.xlu0 %606
    %609 = vset.pattern.permute.xlu0 1
    %610 = vperm.xlu0 %609, %v384
    %v611 = vpop.permute.xlu0 %610
    %613 = vset.pattern.permute.xlu0 1
    %614 = vperm.xlu0 %613, %v387
    %v615 = vpop.permute.xlu0 %614
    %v617 = vlaneseq
    %v618 = vshrl.u32 %v617, 7
    %v619 = vsub.s32 1, %v618
    %v620 = vrot.slane %v432, %v619
    %v621 = vadd.f32 %v603, %v620
    %v622 = vadd.f32 %v607, %v620
    %v623 = vadd.f32 %v611, %v620
    %v624 = vadd.f32 %v615, %v620
    %vm625 = vcmp.gt.f32.partialorder %v621, 0.0
    %vm626 = vcmp.gt.f32.partialorder %v622, 0.0
    %vm627 = vcmp.gt.f32.partialorder %v623, 0.0
    %vm628 = vcmp.gt.f32.partialorder %v624, 0.0
    %v629 = vmul.f32 %v621, 0.2
    %v630 = vmul.f32 %v622, 0.2
    %v631 = vmul.f32 %v623, 0.2
    %v632 = vmul.f32 %v624, 0.2
    %v633 = vsel %vm625, %v621, %v629
    %v634 = vsel %vm626, %v622, %v630
    %v635 = vsel %vm627, %v623, %v631
    %v636 = vsel %vm628, %v624, %v632
    %v637 = vadd.f32 %v633, %v35
    %v638 = vadd.f32 %v634, %v36
    %v639 = vadd.f32 %v635, %v37
    %v640 = vadd.f32 %v636, %v38
    %v641 = vmul.f32 %v637, 1.442695
    %v642 = vpow.pop %v641
    %v643 = vmul.f32 %v638, 1.442695
    %v644 = vpow.pop %v643
    %v645 = vmul.f32 %v639, 1.442695
    %v646 = vpow.pop %v645
    %v647 = vmul.f32 %v640, 1.442695
    %v648 = vpow.pop %v647
    %v649 = vsel %vm489, %v642, 0.0
    %650 = vadd.xlane.f32.xlu0 %v649
    %v651 = vpop.xlane.xlu0 %650
    %v652 = vsel %vm489, %v644, 0.0
    %653 = vadd.xlane.f32.xlu0 %v652
    %v654 = vpop.xlane.xlu0 %653
    %v655 = vsel %vm489, %v646, 0.0
    %656 = vadd.xlane.f32.xlu0 %v655
    %v657 = vpop.xlane.xlu0 %656
    %v658 = vsel %vm489, %v648, 0.0
    %659 = vadd.xlane.f32.xlu0 %v658
    %v660 = vpop.xlane.xlu0 %659
    %v661 = vrcp.pop %v651
    %v662 = vrcp.pop %v654
    %v663 = vrcp.pop %v657
    %v664 = vrcp.pop %v660
    %v665 = vmul.f32 %v642, %v661
    %v666 = vmul.f32 %v644, %v662
    %v667 = vmul.f32 %v646, %v663
    %v668 = vmul.f32 %v648, %v664
    %v669 = vpack.c.bf16 %v666, %v665
    %v670 = vpack.c.bf16 %v668, %v667
    %673 = vrot.lane.b32.xlu0 %v241, 64
    %v674 = vpop.permute.xlu0 %673
    %675 = vrot.lane.b32.xlu0 %v243, 64
    %v676 = vpop.permute.xlu0 %675
    %680 = vrot.lane.b32.xlu0 %v515, 64
    %v681 = vpop.permute.xlu0 %680
    %v684 = vsel %vm489, %v669, 0
    %v687 = vsel %vm489, %v670, 0
    %689 = vmatprep.subr.bf16.mxu0 0
    %690 = vmatpush1.bf16.msra.mxu0 %v674
    %691 = vmatprep.subr.bf16.mxu0 0
    %692 = vmatpush1.bf16.msra.mxu0 %v676
    %693 = vmatprep.subr.bf16.mxu0 0
    %694 = vmatpush1.bf16.msra.mxu0 0
    %695 = vmatprep.subr.bf16.mxu0 0
    %696 = vmatpush1.bf16.msra.mxu0 0
    %697 = vmatprep.subr.bf16.mxu0 0
    %698 = vmatpush1.bf16.msra.mxu0 0
    %699 = vmatprep.subr.bf16.mxu0 0
    %700 = vmatpush1.bf16.msra.mxu0 0
    %701 = vmatprep.subr.bf16.mxu0 0
    %702 = vmatpush1.bf16.msra.mxu0 0
    %703 = vmatprep.subr.bf16.mxu0 0
    %704 = vmatpush1.bf16.msra.mxu0 0
    %705 = vmatprep.subr.bf16.mxu0 0
    %706 = vmatpush1.bf16.msra.mxu0 0
    %707 = vmatprep.subr.bf16.mxu0 0
    %708 = vmatpush1.bf16.msra.mxu0 0
    %709 = vmatprep.subr.bf16.mxu0 0
    %710 = vmatpush1.bf16.msra.mxu0 0
    %711 = vmatprep.subr.bf16.mxu0 0
    %712 = vmatpush1.bf16.msra.mxu0 0
    %713 = vmatprep.subr.bf16.mxu0 0
    %714 = vmatpush1.bf16.msra.mxu0 0
    %715 = vmatprep.subr.bf16.mxu0 0
    %716 = vmatpush1.bf16.msra.mxu0 0
    %717 = vmatprep.subr.bf16.mxu0 0
    %718 = vmatpush1.bf16.msra.mxu0 0
    %719 = vmatprep.subr.bf16.mxu0 0
    %720 = vmatpush1.bf16.msra.mxu0 0
    %721 = vmatprep.mubr.bf16.mxu0 0
    %722 = vmatmul.mubr.bf16.gmra.mrb[0].mxu0 %v684
    %v723 = vpop.f32.mrb[0].mxu0
    %v724 = vadd.f32 %v681, %v723
    %v725 = vpop.f32.mrb[0].mxu0
    %v726 = vpop.f32.mrb[0].mxu0
    %v727 = vadd.f32 %v681, %v726
    %v728 = vpop.f32.mrb[0].mxu0
    %729 = vmatprep.mubr.bf16.mxu0 0
    %730 = vmatmul.mubr.bf16.gmra.mrb[0].mxu0 %v687
    %v731 = vpop.f32.mrb[0].mxu0
    %v732 = vadd.f32 %v681, %v731
    %v733 = vpop.f32.mrb[0].mxu0
    %v734 = vpop.f32.mrb[0].mxu0
    %v735 = vadd.f32 %v681, %v734
    %v736 = vpop.f32.mrb[0].mxu0
    %737 = vdwg.mxu0
    %vm738 = vcmp.gt.f32.partialorder %v724, 0.0
    %vm739 = vcmp.gt.f32.partialorder %v727, 0.0
    %vm740 = vcmp.gt.f32.partialorder %v732, 0.0
    %vm741 = vcmp.gt.f32.partialorder %v735, 0.0
    %v742 = vmul.f32 %v724, 0.01
    %v743 = vmul.f32 %v727, 0.01
    %v744 = vmul.f32 %v732, 0.01
    %v745 = vmul.f32 %v735, 0.01
    %v746 = vsel %vm738, %v724, %v742
    %v747 = vsel %vm739, %v727, %v743
    %v748 = vsel %vm740, %v732, %v744
    %v749 = vsel %vm741, %v735, %v745
    %754 = vrot.lane.b32.xlu0 %v746, 64
    %v755 = vpop.permute.xlu0 %754
    %756 = vrot.lane.b32.xlu0 %v747, 64
    %v757 = vpop.permute.xlu0 %756
    %758 = vrot.lane.b32.xlu0 %v748, 64
    %v759 = vpop.permute.xlu0 %758
    %760 = vrot.lane.b32.xlu0 %v749, 64
    %v761 = vpop.permute.xlu0 %760
    %v766 = vmul.f32 %v586, %v755
    %v767 = vmul.f32 %v586, %v757
    %v768 = vmul.f32 %v586, %v759
    %v769 = vmul.f32 %v586, %v761
    %v770 = vadd.f32 %v766, %v594
    %v771 = vadd.f32 %v767, %v594
    %v772 = vadd.f32 %v768, %v594
    %v773 = vadd.f32 %v769, %v594
    %v774 = vpack.c.bf16 %v771, %v770
    %v775 = vpack.c.bf16 %v773, %v772
    %778 = vrot.lane.b32.xlu0 %v774, 64
    %v779 = vpop.permute.xlu0 %778
    %780 = vrot.lane.b32.xlu0 %v775, 64
    %v781 = vpop.permute.xlu0 %780
    %v790 = vunpack.c.l.b16 %v93
    %v791 = vunpack.c.l.b16 %v94
    %v792 = vunpack.c.l.b16 %v95
    %v793 = vunpack.c.l.b16 %v96
    %v794 = vunpack.c.l.b16 %v97
    %v795 = vunpack.c.l.b16 %v98
    %v796 = vunpack.c.l.b16 %v99
    %v797 = vunpack.c.l.b16 %v100
    %v798 = vpack.c.b16 %v791, %v790
    %v799 = vpack.c.b16 %v793, %v792
    %v800 = vpack.c.b16 %v795, %v794
    %v801 = vpack.c.b16 %v797, %v796
    %vm806 = vcmask 523264
    %v808 = vsel %vm806, %v779, 0
    %v811 = vsel %vm806, %v781, 0
    %813 = vmatprep.subr.bf16.mxu0 0
    %814 = vmatpush1.bf16.msra.mxu0 %v798
    %815 = vmatprep.subr.bf16.mxu0 0
    %816 = vmatpush1.bf16.msra.mxu0 %v799
    %817 = vmatprep.subr.bf16.mxu0 0
    %818 = vmatpush1.bf16.msra.mxu0 %v800
    %819 = vmatprep.subr.bf16.mxu0 0
    %820 = vmatpush1.bf16.msra.mxu0 %v801
    %821 = vmatprep.subr.bf16.mxu0 0
    %822 = vmatpush1.bf16.msra.mxu0 0
    %823 = vmatprep.subr.bf16.mxu0 0
    %824 = vmatpush1.bf16.msra.mxu0 0
    %825 = vmatprep.subr.bf16.mxu0 0
    %826 = vmatpush1.bf16.msra.mxu0 0
    %827 = vmatprep.subr.bf16.mxu0 0
    %828 = vmatpush1.bf16.msra.mxu0 0
    %829 = vmatprep.subr.bf16.mxu0 0
    %830 = vmatpush1.bf16.msra.mxu0 0
    %831 = vmatprep.subr.bf16.mxu0 0
    %832 = vmatpush1.bf16.msra.mxu0 0
    %833 = vmatprep.subr.bf16.mxu0 0
    %834 = vmatpush1.bf16.msra.mxu0 0
    %835 = vmatprep.subr.bf16.mxu0 0
    %836 = vmatpush1.bf16.msra.mxu0 0
    %837 = vmatprep.subr.bf16.mxu0 0
    %838 = vmatpush1.bf16.msra.mxu0 0
    %839 = vmatprep.subr.bf16.mxu0 0
    %840 = vmatpush1.bf16.msra.mxu0 0
    %841 = vmatprep.subr.bf16.mxu0 0
    %842 = vmatpush1.bf16.msra.mxu0 0
    %843 = vmatprep.subr.bf16.mxu0 0
    %844 = vmatpush1.bf16.msra.mxu0 0
    %845 = vmatprep.mubr.bf16.mxu0 0
    %846 = vmatmul.mubr.bf16.gmra.mrb[0].mxu0 %v808
    %v847 = vpop.f32.mrb[0].mxu0
    %v848 = vadd.f32 0.0, %v847
    %v849 = vpop.f32.mrb[0].mxu0
    %v850 = vpop.f32.mrb[0].mxu0
    %v851 = vadd.f32 0.0, %v850
    %v852 = vpop.f32.mrb[0].mxu0
    %853 = vmatprep.mubr.bf16.mxu0 0
    %854 = vmatmul.mubr.bf16.gmra.mrb[0].mxu0 %v811
    %v855 = vpop.f32.mrb[0].mxu0
    %v856 = vadd.f32 0.0, %v855
    %v857 = vpop.f32.mrb[0].mxu0
    %v858 = vpop.f32.mrb[0].mxu0
    %v859 = vadd.f32 0.0, %v858
    %v860 = vpop.f32.mrb[0].mxu0
    %861 = vdwg.mxu0
    %v870 = vunpack.c.l.b16 %v85
    %v871 = vunpack.c.l.b16 %v86
    %v872 = vunpack.c.l.b16 %v87
    %v873 = vunpack.c.l.b16 %v88
    %v874 = vunpack.c.l.b16 %v89
    %v875 = vunpack.c.l.b16 %v90
    %v876 = vunpack.c.l.b16 %v91
    %v877 = vunpack.c.l.b16 %v92
    %v878 = vpack.c.b16 %v871, %v870
    %v879 = vpack.c.b16 %v873, %v872
    %v880 = vpack.c.b16 %v875, %v874
    %v881 = vpack.c.b16 %v877, %v876
    %v887 = vsel %vm806, %v599, 0
    %v890 = vsel %vm806, %v600, 0
    %892 = vmatprep.subr.bf16.mxu0 0
    %893 = vmatpush1.bf16.msra.mxu0 %v878
    %894 = vmatprep.subr.bf16.mxu0 0
    %895 = vmatpush1.bf16.msra.mxu0 %v879
    %896 = vmatprep.subr.bf16.mxu0 0
    %897 = vmatpush1.bf16.msra.mxu0 %v880
    %898 = vmatprep.subr.bf16.mxu0 0
    %899 = vmatpush1.bf16.msra.mxu0 %v881
    %900 = vmatprep.subr.bf16.mxu0 0
    %901 = vmatpush1.bf16.msra.mxu0 0
    %902 = vmatprep.subr.bf16.mxu0 0
    %903 = vmatpush1.bf16.msra.mxu0 0
    %904 = vmatprep.subr.bf16.mxu0 0
    %905 = vmatpush1.bf16.msra.mxu0 0
    %906 = vmatprep.subr.bf16.mxu0 0
    %907 = vmatpush1.bf16.msra.mxu0 0
    %908 = vmatprep.subr.bf16.mxu0 0
    %909 = vmatpush1.bf16.msra.mxu0 0
    %910 = vmatprep.subr.bf16.mxu0 0
    %911 = vmatpush1.bf16.msra.mxu0 0
    %912 = vmatprep.subr.bf16.mxu0 0
    %913 = vmatpush1.bf16.msra.mxu0 0
    %914 = vmatprep.subr.bf16.mxu0 0
    %915 = vmatpush1.bf16.msra.mxu0 0
    %916 = vmatprep.subr.bf16.mxu0 0
    %917 = vmatpush1.bf16.msra.mxu0 0
    %918 = vmatprep.subr.bf16.mxu0 0
    %919 = vmatpush1.bf16.msra.mxu0 0
    %920 = vmatprep.subr.bf16.mxu0 0
    %921 = vmatpush1.bf16.msra.mxu0 0
    %922 = vmatprep.subr.bf16.mxu0 0
    %923 = vmatpush1.bf16.msra.mxu0 0
    %924 = vmatprep.mubr.bf16.mxu0 0
    %925 = vmatmul.mubr.bf16.gmra.mrb[0].mxu0 %v887
    %v926 = vpop.f32.mrb[0].mxu0
    %v927 = vadd.f32 %v848, %v926
    %v928 = vpop.f32.mrb[0].mxu0
    %v929 = vpop.f32.mrb[0].mxu0
    %v930 = vadd.f32 %v851, %v929
    %v931 = vpop.f32.mrb[0].mxu0
    %932 = vmatprep.mubr.bf16.mxu0 0
    %933 = vmatmul.mubr.bf16.gmra.mrb[0].mxu0 %v890
    %v934 = vpop.f32.mrb[0].mxu0
    %v935 = vadd.f32 %v856, %v934
    %v936 = vpop.f32.mrb[0].mxu0
    %v937 = vpop.f32.mrb[0].mxu0
    %v938 = vadd.f32 %v859, %v937
    %v939 = vpop.f32.mrb[0].mxu0
    %940 = vdwg.mxu0
    %941 = vset.pattern.permute.xlu0 2
    %942 = vperm.xlu0 %941, %v376
    %v943 = vpop.permute.xlu0 %942
    %945 = vset.pattern.permute.xlu0 2
    %946 = vperm.xlu0 %945, %v379
    %v947 = vpop.permute.xlu0 %946
    %949 = vset.pattern.permute.xlu0 2
    %950 = vperm.xlu0 %949, %v384
    %v951 = vpop.permute.xlu0 %950
    %953 = vset.pattern.permute.xlu0 2
    %954 = vperm.xlu0 %953, %v387
    %v955 = vpop.permute.xlu0 %954
    %v957 = vlaneseq
    %v958 = vshrl.u32 %v957, 7
    %v959 = vsub.s32 2, %v958
    %v960 = vrot.slane %v432, %v959
    %v961 = vadd.f32 %v943, %v960
    %v962 = vadd.f32 %v947, %v960
    %v963 = vadd.f32 %v951, %v960
    %v964 = vadd.f32 %v955, %v960
    %vm965 = vcmp.gt.f32.partialorder %v961, 0.0
    %vm966 = vcmp.gt.f32.partialorder %v962, 0.0
    %vm967 = vcmp.gt.f32.partialorder %v963, 0.0
    %vm968 = vcmp.gt.f32.partialorder %v964, 0.0
    %v969 = vmul.f32 %v961, 0.2
    %v970 = vmul.f32 %v962, 0.2
    %v971 = vmul.f32 %v963, 0.2
    %v972 = vmul.f32 %v964, 0.2
    %v973 = vsel %vm965, %v961, %v969
    %v974 = vsel %vm966, %v962, %v970
    %v975 = vsel %vm967, %v963, %v971
    %v976 = vsel %vm968, %v964, %v972
    %v977 = vadd.f32 %v973, %v35
    %v978 = vadd.f32 %v974, %v36
    %v979 = vadd.f32 %v975, %v37
    %v980 = vadd.f32 %v976, %v38
    %v981 = vmul.f32 %v977, 1.442695
    %v982 = vpow.pop %v981
    %v983 = vmul.f32 %v978, 1.442695
    %v984 = vpow.pop %v983
    %v985 = vmul.f32 %v979, 1.442695
    %v986 = vpow.pop %v985
    %v987 = vmul.f32 %v980, 1.442695
    %v988 = vpow.pop %v987
    %v989 = vsel %vm489, %v982, 0.0
    %990 = vadd.xlane.f32.xlu0 %v989
    %v991 = vpop.xlane.xlu0 %990
    %v992 = vsel %vm489, %v984, 0.0
    %993 = vadd.xlane.f32.xlu0 %v992
    %v994 = vpop.xlane.xlu0 %993
    %v995 = vsel %vm489, %v986, 0.0
    %996 = vadd.xlane.f32.xlu0 %v995
    %v997 = vpop.xlane.xlu0 %996
    %v998 = vsel %vm489, %v988, 0.0
    %999 = vadd.xlane.f32.xlu0 %v998
    %v1000 = vpop.xlane.xlu0 %999
    %v1001 = vrcp.pop %v991
    %v1002 = vrcp.pop %v994
    %v1003 = vrcp.pop %v997
    %v1004 = vrcp.pop %v1000
    %v1005 = vmul.f32 %v982, %v1001
    %v1006 = vmul.f32 %v984, %v1002
    %v1007 = vmul.f32 %v986, %v1003
    %v1008 = vmul.f32 %v988, %v1004
    %v1009 = vpack.c.bf16 %v1006, %v1005
    %v1010 = vpack.c.bf16 %v1008, %v1007
    %v1011 = vlaneseq
    %v1012 = vshrl.u32 %v1011, 7
    %v1013 = vsub.s32 0, %v1012
    %v1014 = vrot.slane %v48, %v1013
    %v1016 = vsel %vm489, %v1009, 0
    %v1019 = vsel %vm489, %v1010, 0
    %1021 = vmatprep.subr.bf16.mxu0 0
    %1022 = vmatpush1.bf16.msra.mxu0 %v242
    %1023 = vmatprep.subr.bf16.mxu0 0
    %1024 = vmatpush1.bf16.msra.mxu0 %v244
    %1025 = vmatprep.subr.bf16.mxu0 0
    %1026 = vmatpush1.bf16.msra.mxu0 0
    %1027 = vmatprep.subr.bf16.mxu0 0
    %1028 = vmatpush1.bf16.msra.mxu0 0
    %1029 = vmatprep.subr.bf16.mxu0 0
    %1030 = vmatpush1.bf16.msra.mxu0 0
    %1031 = vmatprep.subr.bf16.mxu0 0
    %1032 = vmatpush1.bf16.msra.mxu0 0
    %1033 = vmatprep.subr.bf16.mxu0 0
    %1034 = vmatpush1.bf16.msra.mxu0 0
    %1035 = vmatprep.subr.bf16.mxu0 0
    %1036 = vmatpush1.bf16.msra.mxu0 0
    %1037 = vmatprep.subr.bf16.mxu0 0
    %1038 = vmatpush1.bf16.msra.mxu0 0
    %1039 = vmatprep.subr.bf16.mxu0 0
    %1040 = vmatpush1.bf16.msra.mxu0 0
    %1041 = vmatprep.subr.bf16.mxu0 0
    %1042 = vmatpush1.bf16.msra.mxu0 0
    %1043 = vmatprep.subr.bf16.mxu0 0
    %1044 = vmatpush1.bf16.msra.mxu0 0
    %1045 = vmatprep.subr.bf16.mxu0 0
    %1046 = vmatpush1.bf16.msra.mxu0 0
    %1047 = vmatprep.subr.bf16.mxu0 0
    %1048 = vmatpush1.bf16.msra.mxu0 0
    %1049 = vmatprep.subr.bf16.mxu0 0
    %1050 = vmatpush1.bf16.msra.mxu0 0
    %1051 = vmatprep.subr.bf16.mxu0 0
    %1052 = vmatpush1.bf16.msra.mxu0 0
    %1053 = vmatprep.mubr.bf16.mxu0 0
    %1054 = vmatmul.mubr.bf16.gmra.mrb[0].mxu0 %v1016
    %v1055 = vpop.f32.mrb[0].mxu0
    %v1056 = vadd.f32 %v1014, %v1055
    %v1057 = vpop.f32.mrb[0].mxu0
    %v1058 = vpop.f32.mrb[0].mxu0
    %v1059 = vadd.f32 %v1014, %v1058
    %v1060 = vpop.f32.mrb[0].mxu0
    %1061 = vmatprep.mubr.bf16.mxu0 0
    %1062 = vmatmul.mubr.bf16.gmra.mrb[0].mxu0 %v1019
    %v1063 = vpop.f32.mrb[0].mxu0
    %v1064 = vadd.f32 %v1014, %v1063
    %v1065 = vpop.f32.mrb[0].mxu0
    %v1066 = vpop.f32.mrb[0].mxu0
    %v1067 = vadd.f32 %v1014, %v1066
    %v1068 = vpop.f32.mrb[0].mxu0
    %1069 = vdwg.mxu0
    %vm1070 = vcmp.gt.f32.partialorder %v1056, 0.0
    %vm1071 = vcmp.gt.f32.partialorder %v1059, 0.0
    %vm1072 = vcmp.gt.f32.partialorder %v1064, 0.0
    %vm1073 = vcmp.gt.f32.partialorder %v1067, 0.0
    %v1074 = vmul.f32 %v1056, 0.01
    %v1075 = vmul.f32 %v1059, 0.01
    %v1076 = vmul.f32 %v1064, 0.01
    %v1077 = vmul.f32 %v1067, 0.01
    %v1078 = vsel %vm1070, %v1056, %v1074
    %v1079 = vsel %vm1071, %v1059, %v1075
    %v1080 = vsel %vm1072, %v1064, %v1076
    %v1081 = vsel %vm1073, %v1067, %v1077
    %v1082 = vlaneseq
    %v1083 = vshrl.u32 %v1082, 7
    %v1084 = vsub.s32 1, %v1083
    %v1085 = vrot.slane %v48, %v1084
    %v1086 = vmul.f32 %v1085, %v1078
    %v1087 = vmul.f32 %v1085, %v1079
    %v1088 = vmul.f32 %v1085, %v1080
    %v1089 = vmul.f32 %v1085, %v1081
    %v1090 = vlaneseq
    %v1091 = vshrl.u32 %v1090, 7
    %v1092 = vsub.s32 2, %v1091
    %v1093 = vrot.slane %v48, %v1092
    %v1094 = vadd.f32 %v1086, %v1093
    %v1095 = vadd.f32 %v1087, %v1093
    %v1096 = vadd.f32 %v1088, %v1093
    %v1097 = vadd.f32 %v1089, %v1093
    %v1098 = vpack.c.bf16 %v1095, %v1094
    %v1099 = vpack.c.bf16 %v1097, %v1096
    %v1108 = vunpack.c.l.b16 %v101
    %v1109 = vunpack.c.l.b16 %v102
    %v1110 = vunpack.c.l.b16 %v103
    %v1111 = vunpack.c.l.b16 %v104
    %v1112 = vunpack.c.l.b16 %v105
    %v1113 = vunpack.c.l.b16 %v106
    %v1114 = vunpack.c.l.b16 %v107
    %v1115 = vunpack.c.l.b16 %v108
    %v1116 = vpack.c.b16 %v1109, %v1108
    %v1117 = vpack.c.b16 %v1111, %v1110
    %v1118 = vpack.c.b16 %v1113, %v1112
    %v1119 = vpack.c.b16 %v1115, %v1114
    %v1125 = vsel %vm806, %v1098, 0
    %v1128 = vsel %vm806, %v1099, 0
    %1130 = vmatprep.subr.bf16.mxu0 0
    %1131 = vmatpush1.bf16.msra.mxu0 %v1116
    %1132 = vmatprep.subr.bf16.mxu0 0
    %1133 = vmatpush1.bf16.msra.mxu0 %v1117
    %1134 = vmatprep.subr.bf16.mxu0 0
    %1135 = vmatpush1.bf16.msra.mxu0 %v1118
    %1136 = vmatprep.subr.bf16.mxu0 0
    %1137 = vmatpush1.bf16.msra.mxu0 %v1119
    %1138 = vmatprep.subr.bf16.mxu0 0
    %1139 = vmatpush1.bf16.msra.mxu0 0
    %1140 = vmatprep.subr.bf16.mxu0 0
    %1141 = vmatpush1.bf16.msra.mxu0 0
    %1142 = vmatprep.subr.bf16.mxu0 0
    %1143 = vmatpush1.bf16.msra.mxu0 0
    %1144 = vmatprep.subr.bf16.mxu0 0
    %1145 = vmatpush1.bf16.msra.mxu0 0
    %1146 = vmatprep.subr.bf16.mxu0 0
    %1147 = vmatpush1.bf16.msra.mxu0 0
    %1148 = vmatprep.subr.bf16.mxu0 0
    %1149 = vmatpush1.bf16.msra.mxu0 0
    %1150 = vmatprep.subr.bf16.mxu0 0
    %1151 = vmatpush1.bf16.msra.mxu0 0
    %1152 = vmatprep.subr.bf16.mxu0 0
    %1153 = vmatpush1.bf16.msra.mxu0 0
    %1154 = vmatprep.subr.bf16.mxu0 0
    %1155 = vmatpush1.bf16.msra.mxu0 0
    %1156 = vmatprep.subr.bf16.mxu0 0
    %1157 = vmatpush1.bf16.msra.mxu0 0
    %1158 = vmatprep.subr.bf16.mxu0 0
    %1159 = vmatpush1.bf16.msra.mxu0 0
    %1160 = vmatprep.subr.bf16.mxu0 0
    %1161 = vmatpush1.bf16.msra.mxu0 0
    %1162 = vmatprep.mubr.bf16.mxu0 0
    %1163 = vmatmul.mubr.bf16.gmra.mrb[0].mxu0 %v1125
    %v1164 = vpop.f32.mrb[0].mxu0
    %v1165 = vadd.f32 0.0, %v1164
    %v1166 = vpop.f32.mrb[0].mxu0
    %v1167 = vpop.f32.mrb[0].mxu0
    %v1168 = vadd.f32 0.0, %v1167
    %v1169 = vpop.f32.mrb[0].mxu0
    %1170 = vmatprep.mubr.bf16.mxu0 0
    %1171 = vmatmul.mubr.bf16.gmra.mrb[0].mxu0 %v1128
    %v1172 = vpop.f32.mrb[0].mxu0
    %v1173 = vadd.f32 0.0, %v1172
    %v1174 = vpop.f32.mrb[0].mxu0
    %v1175 = vpop.f32.mrb[0].mxu0
    %v1176 = vadd.f32 0.0, %v1175
    %v1177 = vpop.f32.mrb[0].mxu0
    %1178 = vdwg.mxu0
    %v1179 = vadd.f32 %v927, %v1165
    %v1180 = vadd.f32 %v930, %v1168
    %v1181 = vadd.f32 %v935, %v1173
    %v1182 = vadd.f32 %v938, %v1176
    %1183 = vset.pattern.permute.xlu0 3
    %1184 = vperm.xlu0 %1183, %v376
    %v1185 = vpop.permute.xlu0 %1184
    %1187 = vset.pattern.permute.xlu0 3
    %1188 = vperm.xlu0 %1187, %v379
    %v1189 = vpop.permute.xlu0 %1188
    %1191 = vset.pattern.permute.xlu0 3
    %1192 = vperm.xlu0 %1191, %v384
    %v1193 = vpop.permute.xlu0 %1192
    %1195 = vset.pattern.permute.xlu0 3
    %1196 = vperm.xlu0 %1195, %v387
    %v1197 = vpop.permute.xlu0 %1196
    %v1199 = vlaneseq
    %v1200 = vshrl.u32 %v1199, 7
    %v1201 = vsub.s32 3, %v1200
    %v1202 = vrot.slane %v432, %v1201
    %v1203 = vadd.f32 %v1185, %v1202
    %v1204 = vadd.f32 %v1189, %v1202
    %v1205 = vadd.f32 %v1193, %v1202
    %v1206 = vadd.f32 %v1197, %v1202
    %vm1207 = vcmp.gt.f32.partialorder %v1203, 0.0
    %vm1208 = vcmp.gt.f32.partialorder %v1204, 0.0
    %vm1209 = vcmp.gt.f32.partialorder %v1205, 0.0
    %vm1210 = vcmp.gt.f32.partialorder %v1206, 0.0
    %v1211 = vmul.f32 %v1203, 0.2
    %v1212 = vmul.f32 %v1204, 0.2
    %v1213 = vmul.f32 %v1205, 0.2
    %v1214 = vmul.f32 %v1206, 0.2
    %v1215 = vsel %vm1207, %v1203, %v1211
    %v1216 = vsel %vm1208, %v1204, %v1212
    %v1217 = vsel %vm1209, %v1205, %v1213
    %v1218 = vsel %vm1210, %v1206, %v1214
    %v1219 = vadd.f32 %v1215, %v35
    %v1220 = vadd.f32 %v1216, %v36
    %v1221 = vadd.f32 %v1217, %v37
    %v1222 = vadd.f32 %v1218, %v38
    %v1223 = vmul.f32 %v1219, 1.442695
    %v1224 = vpow.pop %v1223
    %v1225 = vmul.f32 %v1220, 1.442695
    %v1226 = vpow.pop %v1225
    %v1227 = vmul.f32 %v1221, 1.442695
    %v1228 = vpow.pop %v1227
    %v1229 = vmul.f32 %v1222, 1.442695
    %v1230 = vpow.pop %v1229
    %v1231 = vsel %vm489, %v1224, 0.0
    %1232 = vadd.xlane.f32.xlu0 %v1231
    %v1233 = vpop.xlane.xlu0 %1232
    %v1234 = vsel %vm489, %v1226, 0.0
    %1235 = vadd.xlane.f32.xlu0 %v1234
    %v1236 = vpop.xlane.xlu0 %1235
    %v1237 = vsel %vm489, %v1228, 0.0
    %1238 = vadd.xlane.f32.xlu0 %v1237
    %v1239 = vpop.xlane.xlu0 %1238
    %v1240 = vsel %vm489, %v1230, 0.0
    %1241 = vadd.xlane.f32.xlu0 %v1240
    %v1242 = vpop.xlane.xlu0 %1241
    %v1243 = vrcp.pop %v1233
    %v1244 = vrcp.pop %v1236
    %v1245 = vrcp.pop %v1239
    %v1246 = vrcp.pop %v1242
    %v1247 = vmul.f32 %v1224, %v1243
    %v1248 = vmul.f32 %v1226, %v1244
    %v1249 = vmul.f32 %v1228, %v1245
    %v1250 = vmul.f32 %v1230, %v1246
    %v1251 = vpack.c.bf16 %v1248, %v1247
    %v1252 = vpack.c.bf16 %v1250, %v1249
    %1255 = vrot.lane.b32.xlu0 %v242, 64
    %v1256 = vpop.permute.xlu0 %1255
    %1257 = vrot.lane.b32.xlu0 %v244, 64
    %v1258 = vpop.permute.xlu0 %1257
    %1262 = vrot.lane.b32.xlu0 %v1014, 64
    %v1263 = vpop.permute.xlu0 %1262
    %v1266 = vsel %vm489, %v1251, 0
    %v1269 = vsel %vm489, %v1252, 0
    %1271 = vmatprep.subr.bf16.mxu0 0
    %1272 = vmatpush1.bf16.msra.mxu0 %v1256
    %1273 = vmatprep.subr.bf16.mxu0 0
    %1274 = vmatpush1.bf16.msra.mxu0 %v1258
    %1275 = vmatprep.subr.bf16.mxu0 0
    %1276 = vmatpush1.bf16.msra.mxu0 0
    %1277 = vmatprep.subr.bf16.mxu0 0
    %1278 = vmatpush1.bf16.msra.mxu0 0
    %1279 = vmatprep.subr.bf16.mxu0 0
    %1280 = vmatpush1.bf16.msra.mxu0 0
    %1281 = vmatprep.subr.bf16.mxu0 0
    %1282 = vmatpush1.bf16.msra.mxu0 0
    %1283 = vmatprep.subr.bf16.mxu0 0
    %1284 = vmatpush1.bf16.msra.mxu0 0
    %1285 = vmatprep.subr.bf16.mxu0 0
    %1286 = vmatpush1.bf16.msra.mxu0 0
    %1287 = vmatprep.subr.bf16.mxu0 0
    %1288 = vmatpush1.bf16.msra.mxu0 0
    %1289 = vmatprep.subr.bf16.mxu0 0
    %1290 = vmatpush1.bf16.msra.mxu0 0
    %1291 = vmatprep.subr.bf16.mxu0 0
    %1292 = vmatpush1.bf16.msra.mxu0 0
    %1293 = vmatprep.subr.bf16.mxu0 0
    %1294 = vmatpush1.bf16.msra.mxu0 0
    %1295 = vmatprep.subr.bf16.mxu0 0
    %1296 = vmatpush1.bf16.msra.mxu0 0
    %1297 = vmatprep.subr.bf16.mxu0 0
    %1298 = vmatpush1.bf16.msra.mxu0 0
    %1299 = vmatprep.subr.bf16.mxu0 0
    %1300 = vmatpush1.bf16.msra.mxu0 0
    %1301 = vmatprep.subr.bf16.mxu0 0
    %1302 = vmatpush1.bf16.msra.mxu0 0
    %1303 = vmatprep.mubr.bf16.mxu0 0
    %1304 = vmatmul.mubr.bf16.gmra.mrb[0].mxu0 %v1266
    %v1305 = vpop.f32.mrb[0].mxu0
    %v1306 = vadd.f32 %v1263, %v1305
    %v1307 = vpop.f32.mrb[0].mxu0
    %v1308 = vpop.f32.mrb[0].mxu0
    %v1309 = vadd.f32 %v1263, %v1308
    %v1310 = vpop.f32.mrb[0].mxu0
    %1311 = vmatprep.mubr.bf16.mxu0 0
    %1312 = vmatmul.mubr.bf16.gmra.mrb[0].mxu0 %v1269
    %v1313 = vpop.f32.mrb[0].mxu0
    %v1314 = vadd.f32 %v1263, %v1313
    %v1315 = vpop.f32.mrb[0].mxu0
    %v1316 = vpop.f32.mrb[0].mxu0
    %v1317 = vadd.f32 %v1263, %v1316
    %v1318 = vpop.f32.mrb[0].mxu0
    %1319 = vdwg.mxu0
    %vm1320 = vcmp.gt.f32.partialorder %v1306, 0.0
    %vm1321 = vcmp.gt.f32.partialorder %v1309, 0.0
    %vm1322 = vcmp.gt.f32.partialorder %v1314, 0.0
    %vm1323 = vcmp.gt.f32.partialorder %v1317, 0.0
    %v1324 = vmul.f32 %v1306, 0.01
    %v1325 = vmul.f32 %v1309, 0.01
    %v1326 = vmul.f32 %v1314, 0.01
    %v1327 = vmul.f32 %v1317, 0.01
    %v1328 = vsel %vm1320, %v1306, %v1324
    %v1329 = vsel %vm1321, %v1309, %v1325
    %v1330 = vsel %vm1322, %v1314, %v1326
    %v1331 = vsel %vm1323, %v1317, %v1327
    %1336 = vrot.lane.b32.xlu0 %v1328, 64
    %v1337 = vpop.permute.xlu0 %1336
    %1338 = vrot.lane.b32.xlu0 %v1329, 64
    %v1339 = vpop.permute.xlu0 %1338
    %1340 = vrot.lane.b32.xlu0 %v1330, 64
    %v1341 = vpop.permute.xlu0 %1340
    %1342 = vrot.lane.b32.xlu0 %v1331, 64
    %v1343 = vpop.permute.xlu0 %1342
    %v1348 = vmul.f32 %v1085, %v1337
    %v1349 = vmul.f32 %v1085, %v1339
    %v1350 = vmul.f32 %v1085, %v1341
    %v1351 = vmul.f32 %v1085, %v1343
    %v1352 = vadd.f32 %v1348, %v1093
    %v1353 = vadd.f32 %v1349, %v1093
    %v1354 = vadd.f32 %v1350, %v1093
    %v1355 = vadd.f32 %v1351, %v1093
    %v1356 = vpack.c.bf16 %v1353, %v1352
    %v1357 = vpack.c.bf16 %v1355, %v1354
    %1360 = vrot.lane.b32.xlu0 %v1356, 64
    %v1361 = vpop.permute.xlu0 %1360
    %1362 = vrot.lane.b32.xlu0 %v1357, 64
    %v1363 = vpop.permute.xlu0 %1362
    %v1372 = vunpack.c.l.b16 %v109
    %v1373 = vunpack.c.l.b16 %v110
    %v1374 = vunpack.c.l.b16 %v111
    %v1375 = vunpack.c.l.b16 %v112
    %v1376 = vunpack.c.l.b16 %v113
    %v1377 = vunpack.c.l.b16 %v114
    %v1378 = vunpack.c.l.b16 %v115
    %v1379 = vunpack.c.l.b16 %v116
    %v1380 = vpack.c.b16 %v1373, %v1372
    %v1381 = vpack.c.b16 %v1375, %v1374
    %v1382 = vpack.c.b16 %v1377, %v1376
    %v1383 = vpack.c.b16 %v1379, %v1378
    %v1389 = vsel %vm806, %v1361, 0
    %v1392 = vsel %vm806, %v1363, 0
    %1394 = vmatprep.subr.bf16.mxu0 0
    %1395 = vmatpush1.bf16.msra.mxu0 %v1380
    %1396 = vmatprep.subr.bf16.mxu0 0
    %1397 = vmatpush1.bf16.msra.mxu0 %v1381
    %1398 = vmatprep.subr.bf16.mxu0 0
    %1399 = vmatpush1.bf16.msra.mxu0 %v1382
    %1400 = vmatprep.subr.bf16.mxu0 0
    %1401 = vmatpush1.bf16.msra.mxu0 %v1383
    %1402 = vmatprep.subr.bf16.mxu0 0
    %1403 = vmatpush1.bf16.msra.mxu0 0
    %1404 = vmatprep.subr.bf16.mxu0 0
    %1405 = vmatpush1.bf16.msra.mxu0 0
    %1406 = vmatprep.subr.bf16.mxu0 0
    %1407 = vmatpush1.bf16.msra.mxu0 0
    %1408 = vmatprep.subr.bf16.mxu0 0
    %1409 = vmatpush1.bf16.msra.mxu0 0
    %1410 = vmatprep.subr.bf16.mxu0 0
    %1411 = vmatpush1.bf16.msra.mxu0 0
    %1412 = vmatprep.subr.bf16.mxu0 0
    %1413 = vmatpush1.bf16.msra.mxu0 0
    %1414 = vmatprep.subr.bf16.mxu0 0
    %1415 = vmatpush1.bf16.msra.mxu0 0
    %1416 = vmatprep.subr.bf16.mxu0 0
    %1417 = vmatpush1.bf16.msra.mxu0 0
    %1418 = vmatprep.subr.bf16.mxu0 0
    %1419 = vmatpush1.bf16.msra.mxu0 0
    %1420 = vmatprep.subr.bf16.mxu0 0
    %1421 = vmatpush1.bf16.msra.mxu0 0
    %1422 = vmatprep.subr.bf16.mxu0 0
    %1423 = vmatpush1.bf16.msra.mxu0 0
    %1424 = vmatprep.subr.bf16.mxu0 0
    %1425 = vmatpush1.bf16.msra.mxu0 0
    %1426 = vmatprep.mubr.bf16.mxu0 0
    %1427 = vmatmul.mubr.bf16.gmra.mrb[0].mxu0 %v1389
    %v1428 = vpop.f32.mrb[0].mxu0
    %v1429 = vadd.f32 0.0, %v1428
    %v1430 = vpop.f32.mrb[0].mxu0
    %v1431 = vpop.f32.mrb[0].mxu0
    %v1432 = vadd.f32 0.0, %v1431
    %v1433 = vpop.f32.mrb[0].mxu0
    %1434 = vmatprep.mubr.bf16.mxu0 0
    %1435 = vmatmul.mubr.bf16.gmra.mrb[0].mxu0 %v1392
    %v1436 = vpop.f32.mrb[0].mxu0
    %v1437 = vadd.f32 0.0, %v1436
    %v1438 = vpop.f32.mrb[0].mxu0
    %v1439 = vpop.f32.mrb[0].mxu0
    %v1440 = vadd.f32 0.0, %v1439
    %v1441 = vpop.f32.mrb[0].mxu0
    %1442 = vdwg.mxu0
    %v1443 = vadd.f32 %v1179, %v1429
    %v1444 = vadd.f32 %v1180, %v1432
    %v1445 = vadd.f32 %v1181, %v1437
    %v1446 = vadd.f32 %v1182, %v1440
    %v1447 = vpack.c.bf16 %v1444, %v1443
    %v1448 = vpack.c.bf16 %v1446, %v1445
    %v1449 = vlaneseq
    %v1450 = vshrl.u32 %v1449, 7
    %v1451 = vsub.s32 4, %v1450
    %v1452 = vrot.slane %v47, %v1451
    %v1453 = vmul.f32 %v1443, %v1452
    %v1454 = vmul.f32 %v1444, %v1452
    %v1455 = vmul.f32 %v1445, %v1452
    %v1456 = vmul.f32 %v1446, %v1452
    %1457 = vadd.xlane.f32.xlu0 %v1453
    %v1458 = vpop.xlane.xlu0 %1457
    %1459 = vadd.xlane.f32.xlu0 %v1454
    %v1460 = vpop.xlane.xlu0 %1459
    %1461 = vadd.xlane.f32.xlu0 %v1455
    %v1462 = vpop.xlane.xlu0 %1461
    %1463 = vadd.xlane.f32.xlu0 %v1456
    %v1464 = vpop.xlane.xlu0 %1463
    %v1465 = vpack.c.bf16 %v47, %v47
    %v1467 = vshrl.u32 %v1465, 16
    %v1469 = vrot.slane %v1467, 1
    %1471 = vmatprep.subr.bf16.mxu0 0
    %1472 = vmatpush1.bf16.xpose.msra.mxu0 %v1447
    %1473 = vmatprep.subr.bf16.mxu0 0
    %1474 = vmatpush1.bf16.xpose.msra.mxu0 %v1448
    %1475 = vmatprep.subr.bf16.mxu0 0
    %1476 = vmatpush1.bf16.xpose.msra.mxu0 0
    %1477 = vmatprep.subr.bf16.mxu0 0
    %1478 = vmatpush1.bf16.xpose.msra.mxu0 0
    %1479 = vmatprep.subr.bf16.mxu0 0
    %1480 = vmatpush1.bf16.xpose.msra.mxu0 0
    %1481 = vmatprep.subr.bf16.mxu0 0
    %1482 = vmatpush1.bf16.xpose.msra.mxu0 0
    %1483 = vmatprep.subr.bf16.mxu0 0
    %1484 = vmatpush1.bf16.xpose.msra.mxu0 0
    %1485 = vmatprep.subr.bf16.mxu0 0
    %1486 = vmatpush1.bf16.xpose.msra.mxu0 0
    %1487 = vmatprep.subr.bf16.mxu0 0
    %1488 = vmatpush1.bf16.xpose.msra.mxu0 0
    %1489 = vmatprep.subr.bf16.mxu0 0
    %1490 = vmatpush1.bf16.xpose.msra.mxu0 0
    %1491 = vmatprep.subr.bf16.mxu0 0
    %1492 = vmatpush1.bf16.xpose.msra.mxu0 0
    %1493 = vmatprep.subr.bf16.mxu0 0
    %1494 = vmatpush1.bf16.xpose.msra.mxu0 0
    %1495 = vmatprep.subr.bf16.mxu0 0
    %1496 = vmatpush1.bf16.xpose.msra.mxu0 0
    %1497 = vmatprep.subr.bf16.mxu0 0
    %1498 = vmatpush1.bf16.xpose.msra.mxu0 0
    %1499 = vmatprep.subr.bf16.mxu0 0
    %1500 = vmatpush1.bf16.xpose.msra.mxu0 0
    %1501 = vmatprep.subr.bf16.mxu0 0
    %1502 = vmatpush1.bf16.xpose.msra.mxu0 0
    %1503 = vmatprep.mubr.bf16.mxu0 0
    %1504 = vmatmul.mubr.bf16.gmra.mrb[0].mxu0 %v1469
    %v1505 = vpop.f32.mrb[0].mxu0
    %v1506 = vadd.f32 0.0, %v1505
    %v1507 = vpop.f32.mrb[0].mxu0
    %v1508 = vpop.f32.mrb[0].mxu0
    %v1509 = vpop.f32.mrb[0].mxu0
    %1510 = vdwg.mxu0
    %v1511 = vlaneseq
    %v1512 = vshrl.u32 %v1511, 7
    %v1513 = vsub.s32 0, %v1512
    %v1514 = vrot.slane %v1506, %v1513
    %v1515 = vadd.f32 %v1458, %v1514
    %v1516 = vadd.f32 %v1460, %v1514
    %v1517 = vadd.f32 %v1462, %v1514
    %v1518 = vadd.f32 %v1464, %v1514
    %vm1519 = vcmp.gt.f32.partialorder %v1515, 0.0
    %vm1520 = vcmp.gt.f32.partialorder %v1516, 0.0
    %vm1521 = vcmp.gt.f32.partialorder %v1517, 0.0
    %vm1522 = vcmp.gt.f32.partialorder %v1518, 0.0
    %v1523 = vmul.f32 %v1515, 0.2
    %v1524 = vmul.f32 %v1516, 0.2
    %v1525 = vmul.f32 %v1517, 0.2
    %v1526 = vmul.f32 %v1518, 0.2
    %v1527 = vsel %vm1519, %v1515, %v1523
    %v1528 = vsel %vm1520, %v1516, %v1524
    %v1529 = vsel %vm1521, %v1517, %v1525
    %v1530 = vsel %vm1522, %v1518, %v1526
    %v1531 = vadd.f32 %v1527, %v35
    %v1532 = vadd.f32 %v1528, %v36
    %v1533 = vadd.f32 %v1529, %v37
    %v1534 = vadd.f32 %v1530, %v38
    %v1535 = vmul.f32 %v1531, 1.442695
    %v1536 = vpow.pop %v1535
    %v1537 = vmul.f32 %v1532, 1.442695
    %v1538 = vpow.pop %v1537
    %v1539 = vmul.f32 %v1533, 1.442695
    %v1540 = vpow.pop %v1539
    %v1541 = vmul.f32 %v1534, 1.442695
    %v1542 = vpow.pop %v1541
    %v1543 = vsel %vm489, %v1536, 0.0
    %1544 = vadd.xlane.f32.xlu0 %v1543
    %v1545 = vpop.xlane.xlu0 %1544
    %v1546 = vsel %vm489, %v1538, 0.0
    %1547 = vadd.xlane.f32.xlu0 %v1546
    %v1548 = vpop.xlane.xlu0 %1547
    %v1549 = vsel %vm489, %v1540, 0.0
    %1550 = vadd.xlane.f32.xlu0 %v1549
    %v1551 = vpop.xlane.xlu0 %1550
    %v1552 = vsel %vm489, %v1542, 0.0
    %1553 = vadd.xlane.f32.xlu0 %v1552
    %v1554 = vpop.xlane.xlu0 %1553
    %v1555 = vrcp.pop %v1545
    %v1556 = vrcp.pop %v1548
    %v1557 = vrcp.pop %v1551
    %v1558 = vrcp.pop %v1554
    %v1559 = vmul.f32 %v1536, %v1555
    %v1560 = vmul.f32 %v1538, %v1556
    %v1561 = vmul.f32 %v1540, %v1557
    %v1562 = vmul.f32 %v1542, %v1558
    %v1563 = vpack.c.bf16 %v1560, %v1559
    %v1564 = vpack.c.bf16 %v1562, %v1561
    %v1565 = vlaneseq
    %v1566 = vshrl.u32 %v1565, 7
    %v1567 = vsub.s32 5, %v1566
    %v1568 = vrot.slane %v47, %v1567
    %v1570 = vsel %vm489, %v1563, 0
    %v1573 = vsel %vm489, %v1564, 0
    %1575 = vmatprep.subr.bf16.mxu0 0
    %1576 = vmatpush1.bf16.msra.mxu0 %v1447
    %1577 = vmatprep.subr.bf16.mxu0 0
    %1578 = vmatpush1.bf16.msra.mxu0 %v1448
    %1579 = vmatprep.subr.bf16.mxu0 0
    %1580 = vmatpush1.bf16.msra.mxu0 0
    %1581 = vmatprep.subr.bf16.mxu0 0
    %1582 = vmatpush1.bf16.msra.mxu0 0
    %1583 = vmatprep.subr.bf16.mxu0 0
    %1584 = vmatpush1.bf16.msra.mxu0 0
    %1585 = vmatprep.subr.bf16.mxu0 0
    %1586 = vmatpush1.bf16.msra.mxu0 0
    %1587 = vmatprep.subr.bf16.mxu0 0
    %1588 = vmatpush1.bf16.msra.mxu0 0
    %1589 = vmatprep.subr.bf16.mxu0 0
    %1590 = vmatpush1.bf16.msra.mxu0 0
    %1591 = vmatprep.subr.bf16.mxu0 0
    %1592 = vmatpush1.bf16.msra.mxu0 0
    %1593 = vmatprep.subr.bf16.mxu0 0
    %1594 = vmatpush1.bf16.msra.mxu0 0
    %1595 = vmatprep.subr.bf16.mxu0 0
    %1596 = vmatpush1.bf16.msra.mxu0 0
    %1597 = vmatprep.subr.bf16.mxu0 0
    %1598 = vmatpush1.bf16.msra.mxu0 0
    %1599 = vmatprep.subr.bf16.mxu0 0
    %1600 = vmatpush1.bf16.msra.mxu0 0
    %1601 = vmatprep.subr.bf16.mxu0 0
    %1602 = vmatpush1.bf16.msra.mxu0 0
    %1603 = vmatprep.subr.bf16.mxu0 0
    %1604 = vmatpush1.bf16.msra.mxu0 0
    %1605 = vmatprep.subr.bf16.mxu0 0
    %1606 = vmatpush1.bf16.msra.mxu0 0
    %1607 = vmatprep.mubr.bf16.mxu0 0
    %1608 = vmatmul.mubr.bf16.gmra.mrb[0].mxu0 %v1570
    %v1609 = vpop.f32.mrb[0].mxu0
    %v1610 = vadd.f32 %v1568, %v1609
    %v1611 = vpop.f32.mrb[0].mxu0
    %v1612 = vpop.f32.mrb[0].mxu0
    %v1613 = vadd.f32 %v1568, %v1612
    %v1614 = vpop.f32.mrb[0].mxu0
    %1615 = vmatprep.mubr.bf16.mxu0 0
    %1616 = vmatmul.mubr.bf16.gmra.mrb[0].mxu0 %v1573
    %v1617 = vpop.f32.mrb[0].mxu0
    %v1618 = vadd.f32 %v1568, %v1617
    %v1619 = vpop.f32.mrb[0].mxu0
    %v1620 = vpop.f32.mrb[0].mxu0
    %v1621 = vadd.f32 %v1568, %v1620
    %v1622 = vpop.f32.mrb[0].mxu0
    %1623 = vdwg.mxu0
    %vm1624 = vcmp.gt.f32.partialorder %v1610, 0.0
    %vm1625 = vcmp.gt.f32.partialorder %v1613, 0.0
    %vm1626 = vcmp.gt.f32.partialorder %v1618, 0.0
    %vm1627 = vcmp.gt.f32.partialorder %v1621, 0.0
    %v1628 = vmul.f32 %v1610, 0.01
    %v1629 = vmul.f32 %v1613, 0.01
    %v1630 = vmul.f32 %v1618, 0.01
    %v1631 = vmul.f32 %v1621, 0.01
    %v1632 = vsel %vm1624, %v1610, %v1628
    %v1633 = vsel %vm1625, %v1613, %v1629
    %v1634 = vsel %vm1626, %v1618, %v1630
    %v1635 = vsel %vm1627, %v1621, %v1631
    %v1636 = vlaneseq
    %v1637 = vshrl.u32 %v1636, 7
    %v1638 = vsub.s32 6, %v1637
    %v1639 = vrot.slane %v47, %v1638
    %v1640 = vmul.f32 %v1639, %v1632
    %v1641 = vmul.f32 %v1639, %v1633
    %v1642 = vmul.f32 %v1639, %v1634
    %v1643 = vmul.f32 %v1639, %v1635
    %v1644 = vlaneseq
    %v1645 = vshrl.u32 %v1644, 7
    %v1646 = vsub.s32 7, %v1645
    %v1647 = vrot.slane %v47, %v1646
    %v1648 = vadd.f32 %v1640, %v1647
    %v1649 = vadd.f32 %v1641, %v1647
    %v1650 = vadd.f32 %v1642, %v1647
    %v1651 = vadd.f32 %v1643, %v1647
    %v1652 = vpack.c.bf16 %v1649, %v1648
    %v1653 = vpack.c.bf16 %v1651, %v1650
    %v1670 = vunpack.c.l.b16 %v117
    %v1671 = vunpack.c.l.b16 %v118
    %v1672 = vunpack.c.l.b16 %v119
    %v1673 = vunpack.c.l.b16 %v120
    %v1674 = vunpack.c.l.b16 %v121
    %v1675 = vunpack.c.l.b16 %v122
    %v1676 = vunpack.c.l.b16 %v123
    %v1677 = vunpack.c.l.b16 %v124
    %v1678 = vunpack.c.l.b16 %v125
    %v1679 = vunpack.c.l.b16 %v126
    %v1680 = vunpack.c.l.b16 %v127
    %v1681 = vunpack.c.l.b16 %v128
    %v1682 = vunpack.c.l.b16 %v129
    %v1683 = vunpack.c.l.b16 %v130
    %v1684 = vunpack.c.l.b16 %v131
    %v1685 = vunpack.c.l.b16 %v132
    %v1686 = vpack.c.b16 %v1671, %v1670
    %v1687 = vpack.c.b16 %v1673, %v1672
    %v1688 = vpack.c.b16 %v1675, %v1674
    %v1689 = vpack.c.b16 %v1677, %v1676
    %v1690 = vpack.c.b16 %v1679, %v1678
    %v1691 = vpack.c.b16 %v1681, %v1680
    %v1692 = vpack.c.b16 %v1683, %v1682
    %v1693 = vpack.c.b16 %v1685, %v1684
    %1702 = vmatprep.subr.bf16.mxu0 0
    %1703 = vmatpush1.bf16.msra.mxu0 %v1686
    %1704 = vmatprep.subr.bf16.mxu0 0
    %1705 = vmatpush1.bf16.msra.mxu0 %v1687
    %1706 = vmatprep.subr.bf16.mxu0 0
    %1707 = vmatpush1.bf16.msra.mxu0 %v1688
    %1708 = vmatprep.subr.bf16.mxu0 0
    %1709 = vmatpush1.bf16.msra.mxu0 %v1689
    %1710 = vmatprep.subr.bf16.mxu0 0
    %1711 = vmatpush1.bf16.msra.mxu0 %v1690
    %1712 = vmatprep.subr.bf16.mxu0 0
    %1713 = vmatpush1.bf16.msra.mxu0 %v1691
    %1714 = vmatprep.subr.bf16.mxu0 0
    %1715 = vmatpush1.bf16.msra.mxu0 %v1692
    %1716 = vmatprep.subr.bf16.mxu0 0
    %1717 = vmatpush1.bf16.msra.mxu0 %v1693
    %1718 = vmatprep.subr.bf16.mxu0 0
    %1719 = vmatpush1.bf16.msra.mxu0 0
    %1720 = vmatprep.subr.bf16.mxu0 0
    %1721 = vmatpush1.bf16.msra.mxu0 0
    %1722 = vmatprep.subr.bf16.mxu0 0
    %1723 = vmatpush1.bf16.msra.mxu0 0
    %1724 = vmatprep.subr.bf16.mxu0 0
    %1725 = vmatpush1.bf16.msra.mxu0 0
    %1726 = vmatprep.subr.bf16.mxu0 0
    %1727 = vmatpush1.bf16.msra.mxu0 0
    %1728 = vmatprep.subr.bf16.mxu0 0
    %1729 = vmatpush1.bf16.msra.mxu0 0
    %1730 = vmatprep.subr.bf16.mxu0 0
    %1731 = vmatpush1.bf16.msra.mxu0 0
    %1732 = vmatprep.subr.bf16.mxu0 0
    %1733 = vmatpush1.bf16.msra.mxu0 0
    %1734 = vmatprep.mubr.bf16.mxu0 0
    %1735 = vmatmul.mubr.bf16.gmra.mrb[0].mxu0 %v1652
    %v1736 = vpop.f32.mrb[0].mxu0
    %v1737 = vadd.f32 0.0, %v1736
    %v1738 = vpop.f32.mrb[0].mxu0
    %v1739 = vpop.f32.mrb[0].mxu0
    %v1740 = vadd.f32 0.0, %v1739
    %v1741 = vpop.f32.mrb[0].mxu0
    %1742 = vmatprep.mubr.bf16.mxu0 0
    %1743 = vmatmul.mubr.bf16.gmra.mrb[0].mxu0 %v1653
    %v1744 = vpop.f32.mrb[0].mxu0
    %v1745 = vadd.f32 0.0, %v1744
    %v1746 = vpop.f32.mrb[0].mxu0
    %v1747 = vpop.f32.mrb[0].mxu0
    %v1748 = vadd.f32 0.0, %v1747
    %v1749 = vpop.f32.mrb[0].mxu0
    %1750 = vdwg.mxu0
    %v1751 = vpack.c.bf16 %v1740, %v1737
    %v1752 = vpack.c.bf16 %v1748, %v1745
    %v1753 = vlaneseq
    %v1754 = vshrl.u32 %v1753, 7
    %v1755 = vsub.s32 0, %v1754
    %v1756 = vrot.slane %v49, %v1755
    %v1758 = vsel %vm489, %v43, 0
    %v1761 = vsel %vm489, %v44, 0
    %1763 = vmatprep.subr.bf16.mxu0 0
    %1764 = vmatpush1.bf16.msra.mxu0 %v1751
    %1765 = vmatprep.subr.bf16.mxu0 0
    %1766 = vmatpush1.bf16.msra.mxu0 %v1752
    %1767 = vmatprep.subr.bf16.mxu0 0
    %1768 = vmatpush1.bf16.msra.mxu0 0
    %1769 = vmatprep.subr.bf16.mxu0 0
    %1770 = vmatpush1.bf16.msra.mxu0 0
    %1771 = vmatprep.subr.bf16.mxu0 0
    %1772 = vmatpush1.bf16.msra.mxu0 0
    %1773 = vmatprep.subr.bf16.mxu0 0
    %1774 = vmatpush1.bf16.msra.mxu0 0
    %1775 = vmatprep.subr.bf16.mxu0 0
    %1776 = vmatpush1.bf16.msra.mxu0 0
    %1777 = vmatprep.subr.bf16.mxu0 0
    %1778 = vmatpush1.bf16.msra.mxu0 0
    %1779 = vmatprep.subr.bf16.mxu0 0
    %1780 = vmatpush1.bf16.msra.mxu0 0
    %1781 = vmatprep.subr.bf16.mxu0 0
    %1782 = vmatpush1.bf16.msra.mxu0 0
    %1783 = vmatprep.subr.bf16.mxu0 0
    %1784 = vmatpush1.bf16.msra.mxu0 0
    %1785 = vmatprep.subr.bf16.mxu0 0
    %1786 = vmatpush1.bf16.msra.mxu0 0
    %1787 = vmatprep.subr.bf16.mxu0 0
    %1788 = vmatpush1.bf16.msra.mxu0 0
    %1789 = vmatprep.subr.bf16.mxu0 0
    %1790 = vmatpush1.bf16.msra.mxu0 0
    %1791 = vmatprep.subr.bf16.mxu0 0
    %1792 = vmatpush1.bf16.msra.mxu0 0
    %1793 = vmatprep.subr.bf16.mxu0 0
    %1794 = vmatpush1.bf16.msra.mxu0 0
    %1795 = vmatprep.mubr.bf16.mxu0 0
    %1796 = vmatmul.mubr.bf16.gmra.mrb[0].mxu0 %v1758
    %v1797 = vpop.f32.mrb[0].mxu0
    %v1798 = vadd.f32 %v1756, %v1797
    %v1799 = vpop.f32.mrb[0].mxu0
    %v1800 = vpop.f32.mrb[0].mxu0
    %v1801 = vadd.f32 %v1756, %v1800
    %v1802 = vpop.f32.mrb[0].mxu0
    %1803 = vmatprep.mubr.bf16.mxu0 0
    %1804 = vmatmul.mubr.bf16.gmra.mrb[0].mxu0 %v1761
    %v1805 = vpop.f32.mrb[0].mxu0
    %v1806 = vadd.f32 %v1756, %v1805
    %v1807 = vpop.f32.mrb[0].mxu0
    %v1808 = vpop.f32.mrb[0].mxu0
    %v1809 = vadd.f32 %v1756, %v1808
    %v1810 = vpop.f32.mrb[0].mxu0
    %1811 = vdwg.mxu0
    %vm1812 = vcmp.gt.f32.partialorder %v1798, 0.0
    %vm1813 = vcmp.gt.f32.partialorder %v1801, 0.0
    %vm1814 = vcmp.gt.f32.partialorder %v1806, 0.0
    %vm1815 = vcmp.gt.f32.partialorder %v1809, 0.0
    %v1816 = vmul.f32 %v1798, 0.01
    %v1817 = vmul.f32 %v1801, 0.01
    %v1818 = vmul.f32 %v1806, 0.01
    %v1819 = vmul.f32 %v1809, 0.01
    %v1820 = vsel %vm1812, %v1798, %v1816
    %v1821 = vsel %vm1813, %v1801, %v1817
    %v1822 = vsel %vm1814, %v1806, %v1818
    %v1823 = vsel %vm1815, %v1809, %v1819
    %v1824 = vpack.c.bf16 %v1821, %v1820
    %v1825 = vpack.c.bf16 %v1823, %v1822
    %v1827 = vsel %vm489, %v46, 0
    %1829 = vmatprep.subr.bf16.mxu0 0
    %1830 = vmatpush1.bf16.msra.mxu0 %v1824
    %1831 = vmatprep.subr.bf16.mxu0 0
    %1832 = vmatpush1.bf16.msra.mxu0 %v1825
    %1833 = vmatprep.subr.bf16.mxu0 0
    %1834 = vmatpush1.bf16.msra.mxu0 0
    %1835 = vmatprep.subr.bf16.mxu0 0
    %1836 = vmatpush1.bf16.msra.mxu0 0
    %1837 = vmatprep.subr.bf16.mxu0 0
    %1838 = vmatpush1.bf16.msra.mxu0 0
    %1839 = vmatprep.subr.bf16.mxu0 0
    %1840 = vmatpush1.bf16.msra.mxu0 0
    %1841 = vmatprep.subr.bf16.mxu0 0
    %1842 = vmatpush1.bf16.msra.mxu0 0
    %1843 = vmatprep.subr.bf16.mxu0 0
    %1844 = vmatpush1.bf16.msra.mxu0 0
    %1845 = vmatprep.subr.bf16.mxu0 0
    %1846 = vmatpush1.bf16.msra.mxu0 0
    %1847 = vmatprep.subr.bf16.mxu0 0
    %1848 = vmatpush1.bf16.msra.mxu0 0
    %1849 = vmatprep.subr.bf16.mxu0 0
    %1850 = vmatpush1.bf16.msra.mxu0 0
    %1851 = vmatprep.subr.bf16.mxu0 0
    %1852 = vmatpush1.bf16.msra.mxu0 0
    %1853 = vmatprep.subr.bf16.mxu0 0
    %1854 = vmatpush1.bf16.msra.mxu0 0
    %1855 = vmatprep.subr.bf16.mxu0 0
    %1856 = vmatpush1.bf16.msra.mxu0 0
    %1857 = vmatprep.subr.bf16.mxu0 0
    %1858 = vmatpush1.bf16.msra.mxu0 0
    %1859 = vmatprep.subr.bf16.mxu0 0
    %1860 = vmatpush1.bf16.msra.mxu0 0
    %1861 = vmatprep.mubr.bf16.mxu0 0
    %1862 = vmatmul.mubr.bf16.gmra.mrb[0].mxu0 %v1827
    %v1863 = vpop.f32.mrb[0].mxu0
    %v1864 = vadd.f32 0.0, %v1863
    %v1865 = vpop.f32.mrb[0].mxu0
    %v1866 = vpop.f32.mrb[0].mxu0
    %v1867 = vpop.f32.mrb[0].mxu0
    %1868 = vdwg.mxu0
    %v1869 = vpack.c.bf16 %v1864, %v1864
    %v1870 = vlaneseq
    %v1871 = vshrl.u32 %v1870, 7
    %v1872 = vsub.s32 1, %v1871
    %v1873 = vrot.slane %v49, %v1872
    %v1890 = vunpack.c.l.b16 %v133
    %v1891 = vunpack.c.l.b16 %v134
    %v1892 = vunpack.c.l.b16 %v135
    %v1893 = vunpack.c.l.b16 %v136
    %v1894 = vunpack.c.l.b16 %v137
    %v1895 = vunpack.c.l.b16 %v138
    %v1896 = vunpack.c.l.b16 %v139
    %v1897 = vunpack.c.l.b16 %v140
    %v1898 = vunpack.c.l.b16 %v141
    %v1899 = vunpack.c.l.b16 %v142
    %v1900 = vunpack.c.l.b16 %v143
    %v1901 = vunpack.c.l.b16 %v144
    %v1902 = vunpack.c.l.b16 %v145
    %v1903 = vunpack.c.l.b16 %v146
    %v1904 = vunpack.c.l.b16 %v147
    %v1905 = vunpack.c.l.b16 %v148
    %v1906 = vpack.c.b16 %v1891, %v1890
    %v1907 = vpack.c.b16 %v1893, %v1892
    %v1908 = vpack.c.b16 %v1895, %v1894
    %v1909 = vpack.c.b16 %v1897, %v1896
    %v1910 = vpack.c.b16 %v1899, %v1898
    %v1911 = vpack.c.b16 %v1901, %v1900
    %v1912 = vpack.c.b16 %v1903, %v1902
    %v1913 = vpack.c.b16 %v1905, %v1904
    %1922 = vmatprep.subr.bf16.mxu0 0
    %1923 = vmatpush1.bf16.msra.mxu0 %v1906
    %1924 = vmatprep.subr.bf16.mxu0 0
    %1925 = vmatpush1.bf16.msra.mxu0 %v1907
    %1926 = vmatprep.subr.bf16.mxu0 0
    %1927 = vmatpush1.bf16.msra.mxu0 %v1908
    %1928 = vmatprep.subr.bf16.mxu0 0
    %1929 = vmatpush1.bf16.msra.mxu0 %v1909
    %1930 = vmatprep.subr.bf16.mxu0 0
    %1931 = vmatpush1.bf16.msra.mxu0 %v1910
    %1932 = vmatprep.subr.bf16.mxu0 0
    %1933 = vmatpush1.bf16.msra.mxu0 %v1911
    %1934 = vmatprep.subr.bf16.mxu0 0
    %1935 = vmatpush1.bf16.msra.mxu0 %v1912
    %1936 = vmatprep.subr.bf16.mxu0 0
    %1937 = vmatpush1.bf16.msra.mxu0 %v1913
    %1938 = vmatprep.subr.bf16.mxu0 0
    %1939 = vmatpush1.bf16.msra.mxu0 0
    %1940 = vmatprep.subr.bf16.mxu0 0
    %1941 = vmatpush1.bf16.msra.mxu0 0
    %1942 = vmatprep.subr.bf16.mxu0 0
    %1943 = vmatpush1.bf16.msra.mxu0 0
    %1944 = vmatprep.subr.bf16.mxu0 0
    %1945 = vmatpush1.bf16.msra.mxu0 0
    %1946 = vmatprep.subr.bf16.mxu0 0
    %1947 = vmatpush1.bf16.msra.mxu0 0
    %1948 = vmatprep.subr.bf16.mxu0 0
    %1949 = vmatpush1.bf16.msra.mxu0 0
    %1950 = vmatprep.subr.bf16.mxu0 0
    %1951 = vmatpush1.bf16.msra.mxu0 0
    %1952 = vmatprep.subr.bf16.mxu0 0
    %1953 = vmatpush1.bf16.msra.mxu0 0
    %1954 = vmatprep.mubr.bf16.mxu0 0
    %1955 = vmatmul.mubr.bf16.gmra.mrb[0].mxu0 %v1869
    %v1956 = vpop.f32.mrb[0].mxu0
    %v1957 = vadd.f32 %v1873, %v1956
    %v1958 = vpop.f32.mrb[0].mxu0
    %v1959 = vpop.f32.mrb[0].mxu0
    %v1960 = vpop.f32.mrb[0].mxu0
    %1961 = vdwg.mxu0
    %v1962 = vlaneseq
    %v1963 = vshrl.u32 %v1962, 7
    %v1964 = vsub.s32 2, %v1963
    %v1965 = vrot.slane %v49, %v1964
    %v1966 = vmul.f32 %v1965, %v1957
    %v1967 = vlaneseq
    %v1968 = vshrl.u32 %v1967, 7
    %v1969 = vsub.s32 3, %v1968
    %v1970 = vrot.slane %v49, %v1969
    %v1971 = vadd.f32 %v1966, %v1970
    %vm1972 = vcmp.gt.f32.partialorder %v1971, 0.0
    %v1973 = vmul.f32 %v1971, 0.01
    %v1974 = vsel %vm1972, %v1971, %v1973
    %v1975 = vpack.c.bf16 %v1974, %v1974
    %v1976 = vlaneseq
    %v1977 = vshrl.u32 %v1976, 7
    %v1978 = vsub.s32 4, %v1977
    %v1979 = vrot.slane %v49, %v1978
    %v1996 = vunpack.c.l.b16 %v149
    %v1997 = vunpack.c.l.b16 %v150
    %v1998 = vunpack.c.l.b16 %v151
    %v1999 = vunpack.c.l.b16 %v152
    %v2000 = vunpack.c.l.b16 %v153
    %v2001 = vunpack.c.l.b16 %v154
    %v2002 = vunpack.c.l.b16 %v155
    %v2003 = vunpack.c.l.b16 %v156
    %v2004 = vunpack.c.l.b16 %v157
    %v2005 = vunpack.c.l.b16 %v158
    %v2006 = vunpack.c.l.b16 %v159
    %v2007 = vunpack.c.l.b16 %v160
    %v2008 = vunpack.c.l.b16 %v161
    %v2009 = vunpack.c.l.b16 %v162
    %v2010 = vunpack.c.l.b16 %v163
    %v2011 = vunpack.c.l.b16 %v164
    %v2012 = vpack.c.b16 %v1997, %v1996
    %v2013 = vpack.c.b16 %v1999, %v1998
    %v2014 = vpack.c.b16 %v2001, %v2000
    %v2015 = vpack.c.b16 %v2003, %v2002
    %v2016 = vpack.c.b16 %v2005, %v2004
    %v2017 = vpack.c.b16 %v2007, %v2006
    %v2018 = vpack.c.b16 %v2009, %v2008
    %v2019 = vpack.c.b16 %v2011, %v2010
    %2028 = vmatprep.subr.bf16.mxu0 0
    %2029 = vmatpush1.bf16.msra.mxu0 %v2012
    %2030 = vmatprep.subr.bf16.mxu0 0
    %2031 = vmatpush1.bf16.msra.mxu0 %v2013
    %2032 = vmatprep.subr.bf16.mxu0 0
    %2033 = vmatpush1.bf16.msra.mxu0 %v2014
    %2034 = vmatprep.subr.bf16.mxu0 0
    %2035 = vmatpush1.bf16.msra.mxu0 %v2015
    %2036 = vmatprep.subr.bf16.mxu0 0
    %2037 = vmatpush1.bf16.msra.mxu0 %v2016
    %2038 = vmatprep.subr.bf16.mxu0 0
    %2039 = vmatpush1.bf16.msra.mxu0 %v2017
    %2040 = vmatprep.subr.bf16.mxu0 0
    %2041 = vmatpush1.bf16.msra.mxu0 %v2018
    %2042 = vmatprep.subr.bf16.mxu0 0
    %2043 = vmatpush1.bf16.msra.mxu0 %v2019
    %2044 = vmatprep.subr.bf16.mxu0 0
    %2045 = vmatpush1.bf16.msra.mxu0 0
    %2046 = vmatprep.subr.bf16.mxu0 0
    %2047 = vmatpush1.bf16.msra.mxu0 0
    %2048 = vmatprep.subr.bf16.mxu0 0
    %2049 = vmatpush1.bf16.msra.mxu0 0
    %2050 = vmatprep.subr.bf16.mxu0 0
    %2051 = vmatpush1.bf16.msra.mxu0 0
    %2052 = vmatprep.subr.bf16.mxu0 0
    %2053 = vmatpush1.bf16.msra.mxu0 0
    %2054 = vmatprep.subr.bf16.mxu0 0
    %2055 = vmatpush1.bf16.msra.mxu0 0
    %2056 = vmatprep.subr.bf16.mxu0 0
    %2057 = vmatpush1.bf16.msra.mxu0 0
    %2058 = vmatprep.subr.bf16.mxu0 0
    %2059 = vmatpush1.bf16.msra.mxu0 0
    %2060 = vmatprep.mubr.bf16.mxu0 0
    %2061 = vmatmul.mubr.bf16.gmra.mrb[0].mxu0 %v1975
    %v2062 = vpop.f32.mrb[0].mxu0
    %v2063 = vadd.f32 %v1979, %v2062
    %v2064 = vpop.f32.mrb[0].mxu0
    %v2065 = vpop.f32.mrb[0].mxu0
    %v2066 = vpop.f32.mrb[0].mxu0
    %2067 = vdwg.mxu0
    %2068 = vst [vmem:[%s5] sm:$0xff] %v2063
    // Predicated region
    $region26: #{m2_forward.1} parent=1 // pred_check
      _
    $region27: #{m2_forward.1} parent=1 // pred_check_branch
      %2070 = sbr.rel (0) target = $region29
    $region28: #{m2_forward.1} parent=1 // pred_region
      _
    $region29: #{m2_forward.1} parent=1 // pred_fallthru
      _
    // Predicated region
    $region30: #{m2_forward.1} parent=1 // pred_check
      _
    $region31: #{m2_forward.1} parent=1 // pred_check_branch
      %2072 = sbr.rel (0) target = $region33
    $region32: #{m2_forward.1} parent=1 // pred_region
      _
    $region33: #{m2_forward.1} parent=1 // pred_fallthru
      _
    %2073 = vsyncpa [#allocation3], 1

</llo_original>
